<compile_context>
chip_gen: v7x
topology: tpu7x:2x2x1
jax: 0.10.0
libtpu: 0.0.40
codegen_flags: <defaults>
</compile_context>

<pallas_src>
import jax
import jax.numpy as jnp
from jax.experimental import pallas as pl
from jax.experimental.pallas import tpu as pltpu


# ------------------------------- Pallas kernel ------------------------------

def image_gcn_kernel(a_ref, x_ref, w1_ref, w2_ref, wc1_ref, wc2_ref,
                     pool_ref, bias_ref, out_ref):
    # Static sizes from the (static) ref shapes.
    hidden = w1_ref.shape[1]
    hidden_c = wc1_ref.shape[1]

    a = a_ref[...]                                   # [Nb, Nb] f32 block-diag
    x = x_ref[...]                                   # [Nb, Fin] bf16

    b1 = bias_ref[0:1, :hidden]                      # [1, H]       f32
    b2 = bias_ref[1:2, :hidden]                      # [1, H]       f32
    bc1 = bias_ref[2:3, :hidden_c]                   # [1, H/2]     f32
    bc2 = bias_ref[3:4, :]                           # [1, out_pad] f32 (zero padded)

    # GCNConv1: A @ (X @ W1) + b1, ReLU.  Weight matmul on the MXU in bf16
    # (f32 accumulation); the block-diagonal A contraction stays f32.
    xw1 = jnp.dot(x, w1_ref[...], preferred_element_type=jnp.float32)      # [Nb, H]
    h1 = jnp.maximum(
        jnp.dot(a, xw1, preferred_element_type=jnp.float32) + b1, 0.0)     # [Nb, H]

    # GCNConv2: A @ (H1 @ W2) + b2  (no activation, matches forward()).
    hw2 = jnp.dot(h1.astype(jnp.bfloat16), w2_ref[...],
                  preferred_element_type=jnp.float32)                      # [Nb, H]
    h2 = jnp.dot(a, hw2, preferred_element_type=jnp.float32) + b2          # [Nb, H]

    # global_mean_pool for the whole super-block: one [Gb, Nb] (1/n) matmul.
    pooled = jnp.dot(pool_ref[...], h2,
                     preferred_element_type=jnp.float32)                   # [Gb, H]

    # Classifier head (f32): Linear -> ReLU -> Linear (lane-padded to 128).
    z = jnp.maximum(
        jnp.dot(pooled, wc1_ref[...], preferred_element_type=jnp.float32) + bc1,
        0.0)                                                               # [Gb, H/2]
    out_ref[...] = jnp.dot(z, wc2_ref[...],
                           preferred_element_type=jnp.float32) + bc2       # [Gb, out_pad]


def image_gcn_forward(a_graph, x_stack, params, *, graphs_per_block=16,
                      out_pad=128):
    """a_graph: [n, n] shared normalized adjacency; x_stack: [G, n, Fin].

    All images share the same pixel-grid structure, so one block-diagonal
    super-block adjacency is built host-side and kept resident in VMEM.
    # TODO(synk): per-graph adjacencies would need a streamed [G/Gb, Nb, Nb]
    # block-diagonal stack instead of one resident A.
    """
    (w1, b1, w2, b2, wc1, bc1, wc2, bc2) = params
    num_graphs, n, fin = x_stack.shape
    hidden = w1.shape[1]
    hidden_c = wc1.shape[1]
    out_dim = wc2.shape[1]
    assert out_dim <= out_pad

    # Super-block size: Gb graphs per grid step (Gb*n -> MXU-sized A block).
    gb = max(1, min(graphs_per_block, num_graphs))
    g_pad = ((num_graphs + gb - 1) // gb) * gb
    g_steps = g_pad // gb
    nb = gb * n

    # Block-diagonal super-block adjacency (f32, resident) and pooling matrix.
    a_blk = jnp.kron(jnp.eye(gb, dtype=jnp.float32),
                     a_graph.astype(jnp.float32))                   # [Nb, Nb]
    pool = jnp.kron(jnp.eye(gb, dtype=jnp.float32),
                    jnp.full((1, n), 1.0 / n, jnp.float32))         # [Gb, Nb]

    # Row-stacked node features, zero-padded to a multiple of Gb graphs.
    if g_pad != num_graphs:
        x_stack = jnp.concatenate(
            [x_stack, jnp.zeros((g_pad - num_graphs, n, fin), x_stack.dtype)],
            axis=0)
    x_all = x_stack.reshape(g_pad * n, fin).astype(jnp.bfloat16)    # [G_pad*n, Fin]

    # bf16 MXU weights for the two feature-transform matmuls.
    w1_bf = w1.astype(jnp.bfloat16)
    w2_bf = w2.astype(jnp.bfloat16)

    # Lane-dense classifier output: zero-pad out_dim -> out_pad (128 lanes).
    wc2p = jnp.zeros((hidden_c, out_pad), jnp.float32).at[:, :out_dim].set(wc2)

    # Pack the 4 bias vectors into one [4, out_pad] resident operand.
    bias = jnp.zeros((4, out_pad), jnp.float32)
    bias = bias.at[0, :hidden].set(b1.reshape(-1))
    bias = bias.at[1, :hidden].set(b2.reshape(-1))
    bias = bias.at[2, :hidden_c].set(bc1.reshape(-1))
    bias = bias.at[3, :out_dim].set(bc2.reshape(-1))

    operands = (a_blk, x_all, w1_bf, w2_bf, wc1, wc2p, pool, bias)

    # Advisory cost hint for the XLA scheduler.
    flops_per_step = (2 * nb * fin * hidden          # X @ W1
                      + 2 * nb * nb * hidden         # A @ XW1
                      + 2 * nb * hidden * hidden     # H1 @ W2
                      + 2 * nb * nb * hidden         # A @ HW2
                      + 2 * gb * nb * hidden         # pooling matmul
                      + 2 * gb * hidden * hidden_c   # head layer 1
                      + 2 * gb * hidden_c * out_pad) # head layer 2
    bytes_accessed = sum(int(op.size) * op.dtype.itemsize for op in operands)
    bytes_accessed += g_pad * out_pad * 4
    cost = pl.CostEstimate(flops=int(g_steps * flops_per_step),
                           transcendentals=0,
                           bytes_accessed=int(bytes_accessed))

    out = pl.pallas_call(
        image_gcn_kernel,
        out_shape=jax.ShapeDtypeStruct((g_pad, out_pad), jnp.float32),
        grid_spec=pltpu.PrefetchScalarGridSpec(
            num_scalar_prefetch=0,
            grid=(g_steps,),
            in_specs=[
                pl.BlockSpec((nb, nb), lambda s: (0, 0)),             # A_blk (resident)
                pl.BlockSpec((nb, fin), lambda s: (s, 0)),            # X super-block
                pl.BlockSpec((fin, hidden), lambda s: (0, 0)),        # W1 (resident)
                pl.BlockSpec((hidden, hidden), lambda s: (0, 0)),     # W2 (resident)
                pl.BlockSpec((hidden, hidden_c), lambda s: (0, 0)),   # Wc1 (resident)
                pl.BlockSpec((hidden_c, out_pad), lambda s: (0, 0)),  # Wc2 padded
                pl.BlockSpec((gb, nb), lambda s: (0, 0)),             # pooling matrix
                pl.BlockSpec((4, out_pad), lambda s: (0, 0)),         # packed biases
            ],
            out_specs=pl.BlockSpec((gb, out_pad), lambda s: (s, 0)),  # (Gb,128) dense
        ),
        compiler_params=pltpu.CompilerParams(
            dimension_semantics=("parallel",)),  # super-block axis shards across TCs
        cost_estimate=cost,
    )(*operands)

    return out[:num_graphs, :out_dim]


# ----------------------------- plain-JAX glue --------------------------------

def build_norm_adj(edge_index, num_nodes):
    """A_hat = D^-1/2 (A + I) D^-1/2, as in PyG GCNConv (single graph)."""
    src, dst = edge_index
    a = jnp.zeros((num_nodes, num_nodes), jnp.float32)
    a = a.at[dst, src].set(1.0)
    a = a + jnp.eye(num_nodes, dtype=jnp.float32)
    deg = a.sum(axis=1)
    dinv = jnp.where(deg > 0, 1.0 / jnp.sqrt(deg), 0.0)
    return dinv[:, None] * a * dinv[None, :]


def grid_edge_index(side):
    """4-neighbor undirected grid-graph edges (both directions), local numbering."""
    edges = []
    for r in range(side):
        for c in range(side):
            nid = r * side + c
            if c + 1 < side:
                edges += [(nid, nid + 1), (nid + 1, nid)]
            if r + 1 < side:
                edges += [(nid, nid + side), (nid + side, nid)]
    return edges


def init_params(key, input_dim, hidden_dim, output_dim):
    ks = jax.random.split(key, 8)

    def glorot(k, shape):
        fan_in, fan_out = shape
        lim = (6.0 / (fan_in + fan_out)) ** 0.5
        return jax.random.uniform(k, shape, jnp.float32, -lim, lim)

    w1 = glorot(ks[0], (input_dim, hidden_dim))
    b1 = jnp.zeros((1, hidden_dim), jnp.float32)
    w2 = glorot(ks[1], (hidden_dim, hidden_dim))
    b2 = jnp.zeros((1, hidden_dim), jnp.float32)
    wc1 = glorot(ks[2], (hidden_dim, hidden_dim // 2))
    bc1 = jax.random.uniform(ks[3], (1, hidden_dim // 2), jnp.float32, -0.1, 0.1)
    wc2 = glorot(ks[4], (hidden_dim // 2, output_dim))
    bc2 = jax.random.uniform(ks[5], (1, output_dim), jnp.float32, -0.1, 0.1)
    return (w1, b1, w2, b2, wc1, bc1, wc2, bc2)


def reference_forward_f32(a_graph, x_stack, params):
    """Pure-f32 semantic reference of the PyTorch forward()."""
    (w1, b1, w2, b2, wc1, bc1, wc2, bc2) = params
    xw1 = jnp.einsum("gnf,fh->gnh", x_stack, w1)
    h1 = jnp.maximum(jnp.einsum("ij,gjh->gih", a_graph, xw1) + b1, 0.0)
    hw2 = jnp.einsum("gnh,hk->gnk", h1, w2)
    h2 = jnp.einsum("ij,gjk->gik", a_graph, hw2) + b2
    pooled = h2.mean(axis=1)
    z = jnp.maximum(pooled @ wc1 + bc1, 0.0)
    return z @ wc2 + bc2


def reference_forward_matched(a_graph, x_stack, params):
    """Reference mirroring the kernel's precision choices exactly
    (bf16 inputs to the two weight matmuls, everything else f32)."""
    (w1, b1, w2, b2, wc1, bc1, wc2, bc2) = params
    x = x_stack.astype(jnp.bfloat16)
    w1b = w1.astype(jnp.bfloat16)
    w2b = w2.astype(jnp.bfloat16)
    a = a_graph.astype(jnp.float32)
    xw1 = jnp.einsum("gnf,fh->gnh", x, w1b, preferred_element_type=jnp.float32)
    h1 = jnp.maximum(jnp.einsum("ij,gjh->gih", a, xw1) + b1, 0.0)
    hw2 = jnp.einsum("gnh,hk->gnk", h1.astype(jnp.bfloat16), w2b,
                     preferred_element_type=jnp.float32)
    h2 = jnp.einsum("ij,gjk->gik", a, hw2) + b2
    pooled = jnp.mean(h2, axis=1)
    z = jnp.maximum(pooled @ wc1 + bc1, 0.0)
    return z @ wc2 + bc2


if __name__ == "__main__":
    key = jax.random.PRNGKey(0)

    # 32 "images", each a 4x4 pixel grid graph -> 16 nodes / graph, 4 channels.
    # With graphs_per_block=16 this gives a 2-step grid of 256x256 super-blocks.
    num_graphs = 32
    side = 4
    nodes_per_graph = side * side            # 16
    input_dim = 4
    hidden_dim = 32
    output_dim = 10

    # Per-graph node features (data.x reshaped per graph).
    key, kx = jax.random.split(key)
    x_stack = jax.random.normal(
        kx, (num_graphs, nodes_per_graph, input_dim), jnp.float32)

    # Every image shares the same pixel-grid structure -> one normalized
    # adjacency block (block-diagonal batch adjacency built in the wrapper).
    edge_index_local = jnp.asarray(grid_edge_index(side), dtype=jnp.int32).T
    a_graph = build_norm_adj(edge_index_local, nodes_per_graph)      # [n, n]

    # Deterministic parameters.
    key, kp = jax.random.split(key)
    params = init_params(kp, input_dim, hidden_dim, output_dim)

    out = image_gcn_forward(a_graph, x_stack, params, graphs_per_block=16)
    out = jax.block_until_ready(out)
    assert out.shape == (num_graphs, output_dim)

    # Tight check vs a precision-matched reference (same bf16/f32 structure).
    ref_matched = reference_forward_matched(a_graph, x_stack, params)
    assert jnp.allclose(out, ref_matched, atol=2e-3, rtol=2e-3), \
        "mismatch vs precision-matched reference"

    # Looser sanity check vs the pure-f32 module semantics.
    ref_f32 = reference_forward_f32(a_graph, x_stack, params)
    assert jnp.allclose(out, ref_f32, atol=5e-2, rtol=5e-2), \
        "mismatch vs f32 semantic reference"

    print("KERNEL_OK")
</pallas_src>

<mosaic_0001>
module attributes {stable_mosaic.version = 11 : i64} {
  func.func @image_gcn_kernel(%arg0: i32, %arg1: memref<256x256xf32, #tpu.memory_space<vmem>>, %arg2: memref<256x4xbf16, #tpu.memory_space<vmem>>, %arg3: memref<4x32xbf16, #tpu.memory_space<vmem>>, %arg4: memref<32x32xbf16, #tpu.memory_space<vmem>>, %arg5: memref<32x16xf32, #tpu.memory_space<vmem>>, %arg6: memref<16x128xf32, #tpu.memory_space<vmem>>, %arg7: memref<16x256xf32, #tpu.memory_space<vmem>>, %arg8: memref<4x128xf32, #tpu.memory_space<vmem>>, %arg9: memref<16x128xf32, #tpu.memory_space<vmem>>) attributes {dimension_semantics = [#tpu.dimension_semantics<parallel>], iteration_bounds = array<i64: 2>, scalar_prefetch = 0 : i64, scratch_operands = 0 : i64, tpu.core_type = #tpu.core_type<tc>, window_params = [{pipeline_mode = #tpu.pipeline_mode<synchronous>, transform_indices = @transform_0, window_bounds = array<i64: 256, 256>}, {transform_indices = @transform_1, window_bounds = array<i64: 256, 4>}, {pipeline_mode = #tpu.pipeline_mode<synchronous>, transform_indices = @transform_2, window_bounds = array<i64: 4, 32>}, {pipeline_mode = #tpu.pipeline_mode<synchronous>, transform_indices = @transform_3, window_bounds = array<i64: 32, 32>}, {pipeline_mode = #tpu.pipeline_mode<synchronous>, transform_indices = @transform_4, window_bounds = array<i64: 32, 16>}, {pipeline_mode = #tpu.pipeline_mode<synchronous>, transform_indices = @transform_5, window_bounds = array<i64: 16, 128>}, {pipeline_mode = #tpu.pipeline_mode<synchronous>, transform_indices = @transform_6, window_bounds = array<i64: 16, 256>}, {pipeline_mode = #tpu.pipeline_mode<synchronous>, transform_indices = @transform_7, window_bounds = array<i64: 4, 128>}, {transform_indices = @transform_8, window_bounds = array<i64: 16, 128>}]} {
    %c0 = arith.constant 0 : index
    %c0_0 = arith.constant 0 : index
    %0 = vector.load %arg1[%c0, %c0_0] : memref<256x256xf32, #tpu.memory_space<vmem>>, vector<256x256xf32>
    %c0_1 = arith.constant 0 : index
    %c0_2 = arith.constant 0 : index
    %1 = vector.load %arg2[%c0_1, %c0_2] : memref<256x4xbf16, #tpu.memory_space<vmem>>, vector<256x4xbf16>
    %c0_3 = arith.constant 0 : index
    %c0_4 = arith.constant 0 : index
    %2 = vector.load %arg8[%c0_3, %c0_4] : memref<4x128xf32, #tpu.memory_space<vmem>>, vector<1x32xf32>
    %c1 = arith.constant 1 : index
    %c0_5 = arith.constant 0 : index
    %3 = vector.load %arg8[%c1, %c0_5] : memref<4x128xf32, #tpu.memory_space<vmem>>, vector<1x32xf32>
    %c2 = arith.constant 2 : index
    %c0_6 = arith.constant 0 : index
    %4 = vector.load %arg8[%c2, %c0_6] : memref<4x128xf32, #tpu.memory_space<vmem>>, vector<1x16xf32>
    %c3 = arith.constant 3 : index
    %c0_7 = arith.constant 0 : index
    %5 = vector.load %arg8[%c3, %c0_7] : memref<4x128xf32, #tpu.memory_space<vmem>>, vector<1x128xf32>
    %c0_8 = arith.constant 0 : index
    %c0_9 = arith.constant 0 : index
    %6 = vector.load %arg3[%c0_8, %c0_9] : memref<4x32xbf16, #tpu.memory_space<vmem>>, vector<4x32xbf16>
    %cst = arith.constant dense<0.000000e+00> : vector<256x32xf32>
    %7 = tpu.matmul %1, %6, %cst {dimension_numbers = #tpu.dot_dimension_numbers<[1], [0], [0], [1], [0, 0, 1, 1], [], []>} : vector<256x4xbf16>, vector<4x32xbf16>, vector<256x32xf32> -> vector<256x32xf32>
    %cst_10 = arith.constant dense<0.000000e+00> : vector<256x32xf32>
    %8 = tpu.matmul %0, %7, %cst_10 {dimension_numbers = #tpu.dot_dimension_numbers<[1], [0], [0], [1], [0, 0, 1, 1], [], []>} : vector<256x256xf32>, vector<256x32xf32>, vector<256x32xf32> -> vector<256x32xf32>
    %9 = vector.broadcast %2 : vector<1x32xf32> to vector<256x32xf32>
    %10 = arith.addf %8, %9 : vector<256x32xf32>
    %cst_11 = arith.constant 0.000000e+00 : f32
    %11 = vector.broadcast %cst_11 : f32 to vector<256x32xf32>
    %12 = arith.maximumf %10, %11 : vector<256x32xf32>
    %13 = arith.truncf %12 : vector<256x32xf32> to vector<256x32xbf16>
    %c0_12 = arith.constant 0 : index
    %c0_13 = arith.constant 0 : index
    %14 = vector.load %arg4[%c0_12, %c0_13] : memref<32x32xbf16, #tpu.memory_space<vmem>>, vector<32x32xbf16>
    %cst_14 = arith.constant dense<0.000000e+00> : vector<256x32xf32>
    %15 = tpu.matmul %13, %14, %cst_14 {dimension_numbers = #tpu.dot_dimension_numbers<[1], [0], [0], [1], [0, 0, 1, 1], [], []>} : vector<256x32xbf16>, vector<32x32xbf16>, vector<256x32xf32> -> vector<256x32xf32>
    %cst_15 = arith.constant dense<0.000000e+00> : vector<256x32xf32>
    %16 = tpu.matmul %0, %15, %cst_15 {dimension_numbers = #tpu.dot_dimension_numbers<[1], [0], [0], [1], [0, 0, 1, 1], [], []>} : vector<256x256xf32>, vector<256x32xf32>, vector<256x32xf32> -> vector<256x32xf32>
    %17 = vector.broadcast %3 : vector<1x32xf32> to vector<256x32xf32>
    %18 = arith.addf %16, %17 : vector<256x32xf32>
    %c0_16 = arith.constant 0 : index
    %c0_17 = arith.constant 0 : index
    %19 = vector.load %arg7[%c0_16, %c0_17] : memref<16x256xf32, #tpu.memory_space<vmem>>, vector<16x256xf32>
    %cst_18 = arith.constant dense<0.000000e+00> : vector<16x32xf32>
    %20 = tpu.matmul %19, %18, %cst_18 {dimension_numbers = #tpu.dot_dimension_numbers<[1], [0], [0], [1], [0, 0, 1, 1], [], []>} : vector<16x256xf32>, vector<256x32xf32>, vector<16x32xf32> -> vector<16x32xf32>
    %c0_19 = arith.constant 0 : index
    %c0_20 = arith.constant 0 : index
    %21 = vector.load %arg5[%c0_19, %c0_20] : memref<32x16xf32, #tpu.memory_space<vmem>>, vector<32x16xf32>
    %cst_21 = arith.constant dense<0.000000e+00> : vector<16x16xf32>
    %22 = tpu.matmul %20, %21, %cst_21 {dimension_numbers = #tpu.dot_dimension_numbers<[1], [0], [0], [1], [0, 0, 1, 1], [], []>} : vector<16x32xf32>, vector<32x16xf32>, vector<16x16xf32> -> vector<16x16xf32>
    %23 = vector.broadcast %4 : vector<1x16xf32> to vector<16x16xf32>
    %24 = arith.addf %22, %23 : vector<16x16xf32>
    %cst_22 = arith.constant 0.000000e+00 : f32
    %25 = vector.broadcast %cst_22 : f32 to vector<16x16xf32>
    %26 = arith.maximumf %24, %25 : vector<16x16xf32>
    %c0_23 = arith.constant 0 : index
    %c0_24 = arith.constant 0 : index
    %27 = vector.load %arg6[%c0_23, %c0_24] : memref<16x128xf32, #tpu.memory_space<vmem>>, vector<16x128xf32>
    %cst_25 = arith.constant dense<0.000000e+00> : vector<16x128xf32>
    %28 = tpu.matmul %26, %27, %cst_25 {dimension_numbers = #tpu.dot_dimension_numbers<[1], [0], [0], [1], [0, 0, 1, 1], [], []>} : vector<16x16xf32>, vector<16x128xf32>, vector<16x128xf32> -> vector<16x128xf32>
    %29 = vector.broadcast %5 : vector<1x128xf32> to vector<16x128xf32>
    %30 = arith.addf %28, %29 : vector<16x128xf32>
    %c0_26 = arith.constant 0 : index
    %c0_27 = arith.constant 0 : index
    %31 = vector.load %arg9[%c0_26, %c0_27] : memref<16x128xf32, #tpu.memory_space<vmem>>, vector<16x128xf32>
    tpu.vector_store %arg9[%c0_26, %c0_27], %30 {strides = array<i32>} : memref<16x128xf32, #tpu.memory_space<vmem>>, vector<16x128xf32>,
    return
  }
  func.func @transform_0(%arg0: i32) -> (i32, i32) {
    %c0_i32 = arith.constant 0 : i32
    %c0_i32_0 = arith.constant 0 : i32
    %c0_i32_1 = arith.constant 0 : i32
    return %c0_i32, %c0_i32_0 : i32, i32
  }
  func.func @transform_1(%arg0: i32) -> (i32, i32) {
    %c0_i32 = arith.constant 0 : i32
    %c0_i32_0 = arith.constant 0 : i32
    return %arg0, %c0_i32 : i32, i32
  }
  func.func @transform_2(%arg0: i32) -> (i32, i32) {
    %c0_i32 = arith.constant 0 : i32
    %c0_i32_0 = arith.constant 0 : i32
    %c0_i32_1 = arith.constant 0 : i32
    return %c0_i32, %c0_i32_0 : i32, i32
  }
  func.func @transform_3(%arg0: i32) -> (i32, i32) {
    %c0_i32 = arith.constant 0 : i32
    %c0_i32_0 = arith.constant 0 : i32
    %c0_i32_1 = arith.constant 0 : i32
    return %c0_i32, %c0_i32_0 : i32, i32
  }
  func.func @transform_4(%arg0: i32) -> (i32, i32) {
    %c0_i32 = arith.constant 0 : i32
    %c0_i32_0 = arith.constant 0 : i32
    %c0_i32_1 = arith.constant 0 : i32
    return %c0_i32, %c0_i32_0 : i32, i32
  }
  func.func @transform_5(%arg0: i32) -> (i32, i32) {
    %c0_i32 = arith.constant 0 : i32
    %c0_i32_0 = arith.constant 0 : i32
    %c0_i32_1 = arith.constant 0 : i32
    return %c0_i32, %c0_i32_0 : i32, i32
  }
  func.func @transform_6(%arg0: i32) -> (i32, i32) {
    %c0_i32 = arith.constant 0 : i32
    %c0_i32_0 = arith.constant 0 : i32
    %c0_i32_1 = arith.constant 0 : i32
    return %c0_i32, %c0_i32_0 : i32, i32
  }
  func.func @transform_7(%arg0: i32) -> (i32, i32) {
    %c0_i32 = arith.constant 0 : i32
    %c0_i32_0 = arith.constant 0 : i32
    %c0_i32_1 = arith.constant 0 : i32
    return %c0_i32, %c0_i32_0 : i32, i32
  }
  func.func @transform_8(%arg0: i32) -> (i32, i32) {
    %c0_i32 = arith.constant 0 : i32
    %c0_i32_0 = arith.constant 0 : i32
    return %arg0, %c0_i32 : i32, i32
  }
}

</mosaic_0001>

<llo_original>
// kernel: tpu_custom_call.1
$region0: #{tpu_custom_call.1}
  #allocation0 [shape = 'u32[]', space=smem, size = 0x4, offset = 0x4, fixed_abs, tag = 'smem constant byte address 0x4 - core index']
  #allocation1 [shape = 'u32[144,128]{1,0:T(1,128)}', space=vmem, size = 0x12000, scoped, tag = 'internal scratch']
  %s0 = inlined_call_operand.hbm [shape: f32[256,256], index: 0, kind: input, shape index: {}]
  %s1 = inlined_call_operand.vmem [shape: bf16[512,4], index: 1, kind: input, shape index: {}]
  %s2 = inlined_call_operand.vmem [shape: bf16[4,32], index: 2, kind: input, shape index: {}]
  %s3 = inlined_call_operand.vmem [shape: bf16[32,32], index: 3, kind: input, shape index: {}]
  %s4 = inlined_call_operand.vmem [shape: f32[32,16], index: 4, kind: input, shape index: {}]
  %s5 = inlined_call_operand.vmem [shape: f32[16,128], index: 5, kind: input, shape index: {}]
  %s6 = inlined_call_operand.vmem [shape: f32[16,256], index: 6, kind: input, shape index: {}]
  %s7 = inlined_call_operand.vmem [shape: f32[4,128], index: 7, kind: input, shape index: {}]
  %s8 = inlined_call_operand.hbm [shape: f32[32,128], index: 8, kind: output, shape index: {}]
  %s9 = sld [smem:[#allocation0]]
  $region69: #{tpu_custom_call.1} parent=0
    _
  %s11 = ssub.s32 1, %s9
  %s12 = scalar_select 0, %s11, %s9
  $region1: #{tpu_custom_call.1} parent=0
    #allocation2 [shape = 'u8[262144]{0}', space=vmem, size = 0x40000, scoped, tag = 'input window, operand 0, single buffered']
    #allocation3 [shape = 's32[2]{0}', space=sflag, size = 0x8, scoped, tag = 'scoped memory for tpu_custom_call.1']
    #allocation4 [shape = 's32[2]{0}', space=sflag, size = 0x8, scoped, tag = 'scoped memory for tpu_custom_call.1']
    #allocation5 [shape = 'u8[16384]{0}', space=vmem, size = 0x4000, scoped, tag = 'output window, operand 0']
    %13 = vsyncpa [#allocation3], 0
    %14 = vsyncpa [#allocation4], 0
    %s15 = scalar_lea.sflag [#allocation4], 1
    %16 = vsyncpa %s15, 0
    loop: start=0, step=1, limit=4
    $region2: #{tpu_custom_call.1} parent=1 // loop_pre_header
      _
    $region3: #{tpu_custom_call.1} parent=1 // loop_header
      %s18 = sphi 0, %s22
      %p19 = scmp.ge.s32.totalorder %s18, 4
      %s26 = sphi 0, %s26
      %s28 = sphi 0, %s26
      %s29 = sphi 0, %s28
      %s43 = sphi 0, %s29
      %s49 = sphi 0, %s51
      %s52 = sphi 0, %s49
      %s53 = sphi 0, %s52
      %s69 = sphi 0, %s53
      %s73 = sphi 0, %s73
      %s75 = sphi 0, %s73
      %s76 = sphi 0, %s75
      %s90 = sphi 0, %s76
      %s94 = sphi 0, %s94
      %s96 = sphi 0, %s94
      %s97 = sphi 0, %s96
      %s111 = sphi 0, %s97
      %s115 = sphi 0, %s115
      %s117 = sphi 0, %s115
      %s118 = sphi 0, %s117
      %s132 = sphi 0, %s118
      %s136 = sphi 0, %s136
      %s138 = sphi 0, %s136
      %s139 = sphi 0, %s138
      %s153 = sphi 0, %s139
      %s157 = sphi 0, %s157
      %s159 = sphi 0, %s157
      %s160 = sphi 0, %s159
      %s174 = sphi 0, %s160
      %s178 = sphi 0, %s178
      %s180 = sphi 0, %s178
      %s181 = sphi 0, %s180
      %s195 = sphi 0, %s181
      %s201 = sphi 0, %s203
      %s204 = sphi 0, %s201
      %s205 = sphi 0, %s204
      %s221 = sphi 0, %s205
    $region4: #{tpu_custom_call.1} parent=1 // loop_header_branch
      %21 = sbr.rel (%p19) target = $region8
    $region5: #{tpu_custom_call.1} parent=1 // loop_body
      %s23 = ssub.s32 %s18, 1
      %s24 = ssub.s32 %s18, 2
      %s25 = sadd.s32 %s18, 1
      %s27 = sadd.s32 %s26, 1
      %p30 = scmp.eq.s32.totalorder %s18, 1
      %p31 = scmp.ne.s32.totalorder %s26, %s28
      %p32 = scmp.eq.s32.totalorder %s18, 0
      %p33 = por %p31, %p32
      %p34 = scmp.ne.s32.totalorder %s26, %s28
      %p35 = scmp.eq.s32.totalorder %s23, 1
      %p36 = por %p34, %p35
      %p37 = scmp.ne.s32.totalorder %s28, %s29
      %p38 = scmp.eq.s32.totalorder %s23, 0
      %p39 = por %p37, %p38
      %p40 = scmp.ne.s32.totalorder %s28, %s29
      %p41 = scmp.eq.s32.totalorder %s24, 1
      %p42 = por %p40, %p41
      %p44 = scmp.ne.s32.totalorder %s29, %s43
      %p45 = scmp.eq.s32.totalorder %s24, 0
      %p46 = por %p44, %p45
      %s47 = ssub.s32 %s18, %s25
      %p48 = scmp.eq.s32.totalorder %s47, 0
      %s50 = sadd.s32 %s49, 1
      %s51 = scalar_select %p48, %s49, %s50
      %p54 = pneg %p48
      %p55 = scmp.eq.s32.totalorder %s18, 1
      %p56 = por %p54, %p55
      %p57 = scmp.ne.s32.totalorder %s49, %s52
      %p58 = scmp.eq.s32.totalorder %s18, 0
      %p59 = por %p57, %p58
      %p60 = scmp.ne.s32.totalorder %s49, %s52
      %p61 = scmp.eq.s32.totalorder %s23, 1
      %p62 = por %p60, %p61
      %p63 = scmp.ne.s32.totalorder %s52, %s53
      %p64 = scmp.eq.s32.totalorder %s23, 0
      %p65 = por %p63, %p64
      %p66 = scmp.ne.s32.totalorder %s52, %s53
      %p67 = scmp.eq.s32.totalorder %s24, 1
      %p68 = por %p66, %p67
      %p70 = scmp.ne.s32.totalorder %s53, %s69
      %p71 = scmp.eq.s32.totalorder %s24, 0
      %p72 = por %p70, %p71
      %s74 = sadd.s32 %s73, 1
      %p77 = scmp.eq.s32.totalorder %s18, 1
      %p78 = scmp.ne.s32.totalorder %s73, %s75
      %p79 = scmp.eq.s32.totalorder %s18, 0
      %p80 = por %p78, %p79
      %p81 = scmp.ne.s32.totalorder %s73, %s75
      %p82 = scmp.eq.s32.totalorder %s23, 1
      %p83 = por %p81, %p82
      %p84 = scmp.ne.s32.totalorder %s75, %s76
      %p85 = scmp.eq.s32.totalorder %s23, 0
      %p86 = por %p84, %p85
      %p87 = scmp.ne.s32.totalorder %s75, %s76
      %p88 = scmp.eq.s32.totalorder %s24, 1
      %p89 = por %p87, %p88
      %p91 = scmp.ne.s32.totalorder %s76, %s90
      %p92 = scmp.eq.s32.totalorder %s24, 0
      %p93 = por %p91, %p92
      %s95 = sadd.s32 %s94, 1
      %p98 = scmp.eq.s32.totalorder %s18, 1
      %p99 = scmp.ne.s32.totalorder %s94, %s96
      %p100 = scmp.eq.s32.totalorder %s18, 0
      %p101 = por %p99, %p100
      %p102 = scmp.ne.s32.totalorder %s94, %s96
      %p103 = scmp.eq.s32.totalorder %s23, 1
      %p104 = por %p102, %p103
      %p105 = scmp.ne.s32.totalorder %s96, %s97
      %p106 = scmp.eq.s32.totalorder %s23, 0
      %p107 = por %p105, %p106
      %p108 = scmp.ne.s32.totalorder %s96, %s97
      %p109 = scmp.eq.s32.totalorder %s24, 1
      %p110 = por %p108, %p109
      %p112 = scmp.ne.s32.totalorder %s97, %s111
      %p113 = scmp.eq.s32.totalorder %s24, 0
      %p114 = por %p112, %p113
      %s116 = sadd.s32 %s115, 1
      %p119 = scmp.eq.s32.totalorder %s18, 1
      %p120 = scmp.ne.s32.totalorder %s115, %s117
      %p121 = scmp.eq.s32.totalorder %s18, 0
      %p122 = por %p120, %p121
      %p123 = scmp.ne.s32.totalorder %s115, %s117
      %p124 = scmp.eq.s32.totalorder %s23, 1
      %p125 = por %p123, %p124
      %p126 = scmp.ne.s32.totalorder %s117, %s118
      %p127 = scmp.eq.s32.totalorder %s23, 0
      %p128 = por %p126, %p127
      %p129 = scmp.ne.s32.totalorder %s117, %s118
      %p130 = scmp.eq.s32.totalorder %s24, 1
      %p131 = por %p129, %p130
      %p133 = scmp.ne.s32.totalorder %s118, %s132
      %p134 = scmp.eq.s32.totalorder %s24, 0
      %p135 = por %p133, %p134
      %s137 = sadd.s32 %s136, 1
      %p140 = scmp.eq.s32.totalorder %s18, 1
      %p141 = scmp.ne.s32.totalorder %s136, %s138
      %p142 = scmp.eq.s32.totalorder %s18, 0
      %p143 = por %p141, %p142
      %p144 = scmp.ne.s32.totalorder %s136, %s138
      %p145 = scmp.eq.s32.totalorder %s23, 1
      %p146 = por %p144, %p145
      %p147 = scmp.ne.s32.totalorder %s138, %s139
      %p148 = scmp.eq.s32.totalorder %s23, 0
      %p149 = por %p147, %p148
      %p150 = scmp.ne.s32.totalorder %s138, %s139
      %p151 = scmp.eq.s32.totalorder %s24, 1
      %p152 = por %p150, %p151
      %p154 = scmp.ne.s32.totalorder %s139, %s153
      %p155 = scmp.eq.s32.totalorder %s24, 0
      %p156 = por %p154, %p155
      %s158 = sadd.s32 %s157, 1
      %p161 = scmp.eq.s32.totalorder %s18, 1
      %p162 = scmp.ne.s32.totalorder %s157, %s159
      %p163 = scmp.eq.s32.totalorder %s18, 0
      %p164 = por %p162, %p163
      %p165 = scmp.ne.s32.totalorder %s157, %s159
      %p166 = scmp.eq.s32.totalorder %s23, 1
      %p167 = por %p165, %p166
      %p168 = scmp.ne.s32.totalorder %s159, %s160
      %p169 = scmp.eq.s32.totalorder %s23, 0
      %p170 = por %p168, %p169
      %p171 = scmp.ne.s32.totalorder %s159, %s160
      %p172 = scmp.eq.s32.totalorder %s24, 1
      %p173 = por %p171, %p172
      %p175 = scmp.ne.s32.totalorder %s160, %s174
      %p176 = scmp.eq.s32.totalorder %s24, 0
      %p177 = por %p175, %p176
      %s179 = sadd.s32 %s178, 1
      %p182 = scmp.eq.s32.totalorder %s18, 1
      %p183 = scmp.ne.s32.totalorder %s178, %s180
      %p184 = scmp.eq.s32.totalorder %s18, 0
      %p185 = por %p183, %p184
      %p186 = scmp.ne.s32.totalorder %s178, %s180
      %p187 = scmp.eq.s32.totalorder %s23, 1
      %p188 = por %p186, %p187
      %p189 = scmp.ne.s32.totalorder %s180, %s181
      %p190 = scmp.eq.s32.totalorder %s23, 0
      %p191 = por %p189, %p190
      %p192 = scmp.ne.s32.totalorder %s180, %s181
      %p193 = scmp.eq.s32.totalorder %s24, 1
      %p194 = por %p192, %p193
      %p196 = scmp.ne.s32.totalorder %s181, %s195
      %p197 = scmp.eq.s32.totalorder %s24, 0
      %p198 = por %p196, %p197
      %s199 = ssub.s32 %s18, %s25
      %p200 = scmp.eq.s32.totalorder %s199, 0
      %s202 = sadd.s32 %s201, 1
      %s203 = scalar_select %p200, %s201, %s202
      %p206 = pneg %p200
      %p207 = scmp.eq.s32.totalorder %s18, 1
      %p208 = por %p206, %p207
      %p209 = scmp.ne.s32.totalorder %s201, %s204
      %p210 = scmp.eq.s32.totalorder %s18, 0
      %p211 = por %p209, %p210
      %p212 = scmp.ne.s32.totalorder %s201, %s204
      %p213 = scmp.eq.s32.totalorder %s23, 1
      %p214 = por %p212, %p213
      %p215 = scmp.ne.s32.totalorder %s204, %s205
      %p216 = scmp.eq.s32.totalorder %s23, 0
      %p217 = por %p215, %p216
      %p218 = scmp.ne.s32.totalorder %s204, %s205
      %p219 = scmp.eq.s32.totalorder %s24, 1
      %p220 = por %p218, %p219
      %p222 = scmp.ne.s32.totalorder %s205, %s221
      %p223 = scmp.eq.s32.totalorder %s24, 0
      %p224 = por %p222, %p223
      %p225 = scmp.le.s32.totalorder 1, %s18
      %p226 = scmp.lt.s32.totalorder %s18, 3
      %p227 = pnand %p225, %p226
      %p228 = pneg %p227
      // Predicated region
      $region9: #{tpu_custom_call.1} parent=5 // pred_check
        _
      $region10: #{tpu_custom_call.1} parent=5 // pred_check_branch
        %230 = sbr.rel (%p227) target = $region12
      $region11: #{tpu_custom_call.1} parent=5 // pred_region
        %s231 = ssub.s32 %s18, 1
        // Predicated region
        $region13: #{tpu_custom_call.1} parent=11 // pred_check
          %p232 = pneg %p39
        $region14: #{tpu_custom_call.1} parent=11 // pred_check_branch
          %234 = sbr.rel (%p232) target = $region16
        $region15: #{tpu_custom_call.1} parent=11 // pred_region
          %s236 = ssub.s32 8192, 8192
          %237 = vsyncadd [#allocation3], %s236
          %s238 = sshll.u32 [#allocation2], 4
          %s239 = int_to_ptr.vmem [resolvable:$true] %s238
          %244 = dma.hbm_to_vmem [thread:$0]  %s0, 8192, %s239, [#allocation3], 256, 256, 16
        $region16: #{tpu_custom_call.1} parent=11 // pred_fallthru
          _
        // Predicated region
        $region17: #{tpu_custom_call.1} parent=11 // pred_check
          %p245 = pneg %p86
        $region18: #{tpu_custom_call.1} parent=11 // pred_check_branch
          %247 = sbr.rel (%p245) target = $region20
        $region19: #{tpu_custom_call.1} parent=11 // pred_region
          _
        $region20: #{tpu_custom_call.1} parent=11 // pred_fallthru
          _
        // Predicated region
        $region21: #{tpu_custom_call.1} parent=11 // pred_check
          %p248 = pneg %p107
        $region22: #{tpu_custom_call.1} parent=11 // pred_check_branch
          %250 = sbr.rel (%p248) target = $region24
        $region23: #{tpu_custom_call.1} parent=11 // pred_region
          _
        $region24: #{tpu_custom_call.1} parent=11 // pred_fallthru
          _
        // Predicated region
        $region25: #{tpu_custom_call.1} parent=11 // pred_check
          %p251 = pneg %p128
        $region26: #{tpu_custom_call.1} parent=11 // pred_check_branch
          %253 = sbr.rel (%p251) target = $region28
        $region27: #{tpu_custom_call.1} parent=11 // pred_region
          _
        $region28: #{tpu_custom_call.1} parent=11 // pred_fallthru
          _
        // Predicated region
        $region29: #{tpu_custom_call.1} parent=11 // pred_check
          %p254 = pneg %p149
        $region30: #{tpu_custom_call.1} parent=11 // pred_check_branch
          %256 = sbr.rel (%p254) target = $region32
        $region31: #{tpu_custom_call.1} parent=11 // pred_region
          _
        $region32: #{tpu_custom_call.1} parent=11 // pred_fallthru
          _
        // Predicated region
        $region33: #{tpu_custom_call.1} parent=11 // pred_check
          %p257 = pneg %p170
        $region34: #{tpu_custom_call.1} parent=11 // pred_check_branch
          %259 = sbr.rel (%p257) target = $region36
        $region35: #{tpu_custom_call.1} parent=11 // pred_region
          _
        $region36: #{tpu_custom_call.1} parent=11 // pred_fallthru
          _
        // Predicated region
        $region37: #{tpu_custom_call.1} parent=11 // pred_check
          %p260 = pneg %p191
        $region38: #{tpu_custom_call.1} parent=11 // pred_check_branch
          %262 = sbr.rel (%p260) target = $region40
        $region39: #{tpu_custom_call.1} parent=11 // pred_region
          _
        $region40: #{tpu_custom_call.1} parent=11 // pred_fallthru
          _
      $region12: #{tpu_custom_call.1} parent=5 // pred_fallthru
        _
      %p263 = scmp.lt.s32.totalorder %s18, 2
      // Predicated region
      $region41: #{tpu_custom_call.1} parent=5 // pred_check
        %p264 = pneg %p263
      $region42: #{tpu_custom_call.1} parent=5 // pred_check_branch
        %266 = sbr.rel (%p264) target = $region44
      $region43: #{tpu_custom_call.1} parent=5 // pred_region
        // Predicated region
        $region45: #{tpu_custom_call.1} parent=43 // pred_check
          %p267 = pneg %p59
        $region46: #{tpu_custom_call.1} parent=43 // pred_check_branch
          %269 = sbr.rel (%p267) target = $region48
        $region47: #{tpu_custom_call.1} parent=43 // pred_region
          %s270 = smul.u32 32, %s18
          %p271 = scmp.lt.s32.totalorder %s270, 63
          %s272 = scalar_select %p271, %s270, 63
          %s273 = smul.addr %s272, 4
          %s274 = scalar_lea.vmem %s1, %s273
          %s275 = smul.u32 32, %s18
        $region48: #{tpu_custom_call.1} parent=43 // pred_fallthru
          _
      $region44: #{tpu_custom_call.1} parent=5 // pred_fallthru
        _
      %p276 = scmp.le.s32.totalorder 1, %s18
      %p277 = scmp.lt.s32.totalorder %s18, 3
      %p278 = pnand %p276, %p277
      %p279 = pneg %p278
      // Predicated region
      $region49: #{tpu_custom_call.1} parent=5 // pred_check
        _
      $region50: #{tpu_custom_call.1} parent=5 // pred_check_branch
        %281 = sbr.rel (%p278) target = $region52
      $region51: #{tpu_custom_call.1} parent=5 // pred_region
        %s282 = ssub.s32 %s18, 1
        // Predicated region
        $region53: #{tpu_custom_call.1} parent=51 // pred_check
          %p283 = pneg %p39
        $region54: #{tpu_custom_call.1} parent=51 // pred_check_branch
          %285 = sbr.rel (%p283) target = $region56
        $region55: #{tpu_custom_call.1} parent=51 // pred_region
          %286 = dma.done [#allocation3], 8192
        $region56: #{tpu_custom_call.1} parent=51 // pred_fallthru
          _
        %p287 = pneg %p39
        %p288 = pneg %p36
        %s289 = smul.u32 32, %s23
        %p290 = scmp.lt.s32.totalorder %s289, 63
        %s291 = scalar_select %p290, %s289, 63
        %s292 = smul.addr %s291, 4
        %s293 = scalar_lea.vmem %s1, %s292
        %p294 = pneg %p65
        %p295 = pneg %p62
        %p296 = pneg %p86
        %p297 = pneg %p83
        %p298 = pneg %p107
        %p299 = pneg %p104
        %p300 = pneg %p128
        %p301 = pneg %p125
        %p302 = pneg %p149
        %p303 = pneg %p146
        %p304 = pneg %p170
        %p305 = pneg %p167
        %p306 = pneg %p191
        %p307 = pneg %p188
        %p308 = pneg %p217
        %p309 = pneg %p214
        %s310 = sand.u32 %s204, 1
        %s311 = scalar_lea.sflag [#allocation4], %s310
        %s312 = sand.u32 %s204, 1
        %s313 = smul.addr %s312, 16
        %s314 = scalar_lea.vmem [#allocation5], %s313
        %s315 = smul.u32 32, %s23
        %p316 = scmp.lt.s32.totalorder %s315, 63
        %s317 = scalar_select %p316, %s315, 63
        %s318 = smul.addr %s317, 4
        %s319 = scalar_lea.vmem %s1, %s318
        %s320 = smul.u32 32, %s23
        %s321 = smul.u32 2, %s23
        %v323 = vld [vmem:[#allocation2] sm:$0xff]
        %v324 = vld [vmem:[#allocation2 + $0x8] sm:$0xff]
        %v325 = vld [vmem:[#allocation2 + $0x10] sm:$0xff]
        %v326 = vld [vmem:[#allocation2 + $0x18] sm:$0xff]
        %v327 = vld [vmem:[#allocation2 + $0x20] sm:$0xff]
        %v328 = vld [vmem:[#allocation2 + $0x28] sm:$0xff]
        %v329 = vld [vmem:[#allocation2 + $0x30] sm:$0xff]
        %v330 = vld [vmem:[#allocation2 + $0x38] sm:$0xff]
        %v331 = vld [vmem:[#allocation2 + $0x40] sm:$0xff]
        %v332 = vld [vmem:[#allocation2 + $0x48] sm:$0xff]
        %v333 = vld [vmem:[#allocation2 + $0x50] sm:$0xff]
        %v334 = vld [vmem:[#allocation2 + $0x58] sm:$0xff]
        %v335 = vld [vmem:[#allocation2 + $0x60] sm:$0xff]
        %v336 = vld [vmem:[#allocation2 + $0x68] sm:$0xff]
        %v337 = vld [vmem:[#allocation2 + $0x70] sm:$0xff]
        %v338 = vld [vmem:[#allocation2 + $0x78] sm:$0xff]
        %v339 = vld [vmem:[#allocation2 + $0x80] sm:$0xff]
        %v340 = vld [vmem:[#allocation2 + $0x88] sm:$0xff]
        %v341 = vld [vmem:[#allocation2 + $0x90] sm:$0xff]
        %v342 = vld [vmem:[#allocation2 + $0x98] sm:$0xff]
        %v343 = vld [vmem:[#allocation2 + $0xa0] sm:$0xff]
        %v344 = vld [vmem:[#allocation2 + $0xa8] sm:$0xff]
        %v345 = vld [vmem:[#allocation2 + $0xb0] sm:$0xff]
        %v346 = vld [vmem:[#allocation2 + $0xb8] sm:$0xff]
        %v347 = vld [vmem:[#allocation2 + $0xc0] sm:$0xff]
        %v348 = vld [vmem:[#allocation2 + $0xc8] sm:$0xff]
        %v349 = vld [vmem:[#allocation2 + $0xd0] sm:$0xff]
        %v350 = vld [vmem:[#allocation2 + $0xd8] sm:$0xff]
        %v351 = vld [vmem:[#allocation2 + $0xe0] sm:$0xff]
        %v352 = vld [vmem:[#allocation2 + $0xe8] sm:$0xff]
        %v353 = vld [vmem:[#allocation2 + $0xf0] sm:$0xff]
        %v354 = vld [vmem:[#allocation2 + $0xf8] sm:$0xff]
        %v355 = vld [vmem:[#allocation2 + $0x100] sm:$0xff]
        %v356 = vld [vmem:[#allocation2 + $0x108] sm:$0xff]
        %v357 = vld [vmem:[#allocation2 + $0x110] sm:$0xff]
        %v358 = vld [vmem:[#allocation2 + $0x118] sm:$0xff]
        %v359 = vld [vmem:[#allocation2 + $0x120] sm:$0xff]
        %v360 = vld [vmem:[#allocation2 + $0x128] sm:$0xff]
        %v361 = vld [vmem:[#allocation2 + $0x130] sm:$0xff]
        %v362 = vld [vmem:[#allocation2 + $0x138] sm:$0xff]
        %v363 = vld [vmem:[#allocation2 + $0x140] sm:$0xff]
        %v364 = vld [vmem:[#allocation2 + $0x148] sm:$0xff]
        %v365 = vld [vmem:[#allocation2 + $0x150] sm:$0xff]
        %v366 = vld [vmem:[#allocation2 + $0x158] sm:$0xff]
        %v367 = vld [vmem:[#allocation2 + $0x160] sm:$0xff]
        %v368 = vld [vmem:[#allocation2 + $0x168] sm:$0xff]
        %v369 = vld [vmem:[#allocation2 + $0x170] sm:$0xff]
        %v370 = vld [vmem:[#allocation2 + $0x178] sm:$0xff]
        %v371 = vld [vmem:[#allocation2 + $0x180] sm:$0xff]
        %v372 = vld [vmem:[#allocation2 + $0x188] sm:$0xff]
        %v373 = vld [vmem:[#allocation2 + $0x190] sm:$0xff]
        %v374 = vld [vmem:[#allocation2 + $0x198] sm:$0xff]
        %v375 = vld [vmem:[#allocation2 + $0x1a0] sm:$0xff]
        %v376 = vld [vmem:[#allocation2 + $0x1a8] sm:$0xff]
        %v377 = vld [vmem:[#allocation2 + $0x1b0] sm:$0xff]
        %v378 = vld [vmem:[#allocation2 + $0x1b8] sm:$0xff]
        %v379 = vld [vmem:[#allocation2 + $0x1c0] sm:$0xff]
        %v380 = vld [vmem:[#allocation2 + $0x1c8] sm:$0xff]
        %v381 = vld [vmem:[#allocation2 + $0x1d0] sm:$0xff]
        %v382 = vld [vmem:[#allocation2 + $0x1d8] sm:$0xff]
        %v383 = vld [vmem:[#allocation2 + $0x1e0] sm:$0xff]
        %v384 = vld [vmem:[#allocation2 + $0x1e8] sm:$0xff]
        %v385 = vld [vmem:[#allocation2 + $0x1f0] sm:$0xff]
        %v386 = vld [vmem:[#allocation2 + $0x1f8] sm:$0xff]
        %v387 = vld [vmem:[%s319] sm:$0xf]
        %v388 = vld [vmem:[%s319 + $0x4] sm:$0xf]
        %v389 = vld [vmem:[%s319 + $0x8] sm:$0xf]
        %v390 = vld [vmem:[%s319 + $0xc] sm:$0xf]
        %v391 = vld [vmem:[%s319 + $0x10] sm:$0xf]
        %v392 = vld [vmem:[%s319 + $0x14] sm:$0xf]
        %v393 = vld [vmem:[%s319 + $0x18] sm:$0xf]
        %v394 = vld [vmem:[%s319 + $0x1c] sm:$0xf]
        %v395 = vld [vmem:[%s319 + $0x20] sm:$0xf]
        %v396 = vld [vmem:[%s319 + $0x24] sm:$0xf]
        %v397 = vld [vmem:[%s319 + $0x28] sm:$0xf]
        %v398 = vld [vmem:[%s319 + $0x2c] sm:$0xf]
        %v399 = vld [vmem:[%s319 + $0x30] sm:$0xf]
        %v400 = vld [vmem:[%s319 + $0x34] sm:$0xf]
        %v401 = vld [vmem:[%s319 + $0x38] sm:$0xf]
        %v402 = vld [vmem:[%s319 + $0x3c] sm:$0xf]
        %v403 = vld [vmem:[%s319 + $0x40] sm:$0xf]
        %v404 = vld [vmem:[%s319 + $0x44] sm:$0xf]
        %v405 = vld [vmem:[%s319 + $0x48] sm:$0xf]
        %v406 = vld [vmem:[%s319 + $0x4c] sm:$0xf]
        %v407 = vld [vmem:[%s319 + $0x50] sm:$0xf]
        %v408 = vld [vmem:[%s319 + $0x54] sm:$0xf]
        %v409 = vld [vmem:[%s319 + $0x58] sm:$0xf]
        %v410 = vld [vmem:[%s319 + $0x5c] sm:$0xf]
        %v411 = vld [vmem:[%s319 + $0x60] sm:$0xf]
        %v412 = vld [vmem:[%s319 + $0x64] sm:$0xf]
        %v413 = vld [vmem:[%s319 + $0x68] sm:$0xf]
        %v414 = vld [vmem:[%s319 + $0x6c] sm:$0xf]
        %v415 = vld [vmem:[%s319 + $0x70] sm:$0xf]
        %v416 = vld [vmem:[%s319 + $0x74] sm:$0xf]
        %v417 = vld [vmem:[%s319 + $0x78] sm:$0xf]
        %v418 = vld [vmem:[%s319 + $0x7c] sm:$0xf]
        %v419 = vld [vmem:[%s7] sm:$0x1]
        %v420 = vld [vmem:[%s7 + $0x1] sm:$0x1]
        %v421 = vld [vmem:[%s7 + $0x2] sm:$0x1]
        %v422 = vld [vmem:[%s7 + $0x3] sm:$0x1]
        %v423 = vld [vmem:[%s2] sm:$0x3]
        %v456 = vunpack.c.l.b16 %v387
        %v457 = vunpack.c.l.b16 %v388
        %v458 = vunpack.c.l.b16 %v389
        %v459 = vunpack.c.l.b16 %v390
        %v460 = vunpack.c.l.b16 %v391
        %v461 = vunpack.c.l.b16 %v392
        %v462 = vunpack.c.l.b16 %v393
        %v463 = vunpack.c.l.b16 %v394
        %v464 = vunpack.c.l.b16 %v395
        %v465 = vunpack.c.l.b16 %v396
        %v466 = vunpack.c.l.b16 %v397
        %v467 = vunpack.c.l.b16 %v398
        %v468 = vunpack.c.l.b16 %v399
        %v469 = vunpack.c.l.b16 %v400
        %v470 = vunpack.c.l.b16 %v401
        %v471 = vunpack.c.l.b16 %v402
        %v472 = vunpack.c.l.b16 %v403
        %v473 = vunpack.c.l.b16 %v404
        %v474 = vunpack.c.l.b16 %v405
        %v475 = vunpack.c.l.b16 %v406
        %v476 = vunpack.c.l.b16 %v407
        %v477 = vunpack.c.l.b16 %v408
        %v478 = vunpack.c.l.b16 %v409
        %v479 = vunpack.c.l.b16 %v410
        %v480 = vunpack.c.l.b16 %v411
        %v481 = vunpack.c.l.b16 %v412
        %v482 = vunpack.c.l.b16 %v413
        %v483 = vunpack.c.l.b16 %v414
        %v484 = vunpack.c.l.b16 %v415
        %v485 = vunpack.c.l.b16 %v416
        %v486 = vunpack.c.l.b16 %v417
        %v487 = vunpack.c.l.b16 %v418
        %v488 = vpack.c.b16 %v457, %v456
        %v489 = vpack.c.b16 %v459, %v458
        %v490 = vpack.c.b16 %v461, %v460
        %v491 = vpack.c.b16 %v463, %v462
        %v492 = vpack.c.b16 %v465, %v464
        %v493 = vpack.c.b16 %v467, %v466
        %v494 = vpack.c.b16 %v469, %v468
        %v495 = vpack.c.b16 %v471, %v470
        %v496 = vpack.c.b16 %v473, %v472
        %v497 = vpack.c.b16 %v475, %v474
        %v498 = vpack.c.b16 %v477, %v476
        %v499 = vpack.c.b16 %v479, %v478
        %v500 = vpack.c.b16 %v481, %v480
        %v501 = vpack.c.b16 %v483, %v482
        %v502 = vpack.c.b16 %v485, %v484
        %v503 = vpack.c.b16 %v487, %v486
        %vm504 = vcmask 31744
        %v506 = vsel %vm504, %v488, 0
        %v509 = vsel %vm504, %v489, 0
        %v512 = vsel %vm504, %v490, 0
        %v515 = vsel %vm504, %v491, 0
        %v518 = vsel %vm504, %v492, 0
        %v521 = vsel %vm504, %v493, 0
        %v524 = vsel %vm504, %v494, 0
        %v527 = vsel %vm504, %v495, 0
        %v530 = vsel %vm504, %v496, 0
        %v533 = vsel %vm504, %v497, 0
        %v536 = vsel %vm504, %v498, 0
        %v539 = vsel %vm504, %v499, 0
        %v542 = vsel %vm504, %v500, 0
        %v545 = vsel %vm504, %v501, 0
        %v548 = vsel %vm504, %v502, 0
        %v551 = vsel %vm504, %v503, 0
        %vm553 = vcmask 1041408
        %v555 = vsel %vm553, %v423, 0
        %557 = vmatprep.subr.bf16.mxu0 0
        %558 = vmatpush1.bf16.msra.mxu0 %v555
        %559 = vmatprep.subr.bf16.mxu0 0
        %560 = vmatpush1.bf16.msra.mxu0 0
        %561 = vmatprep.subr.bf16.mxu0 0
        %562 = vmatpush1.bf16.msra.mxu0 0
        %563 = vmatprep.subr.bf16.mxu0 0
        %564 = vmatpush1.bf16.msra.mxu0 0
        %565 = vmatprep.subr.bf16.mxu0 0
        %566 = vmatpush1.bf16.msra.mxu0 0
        %567 = vmatprep.subr.bf16.mxu0 0
        %568 = vmatpush1.bf16.msra.mxu0 0
        %569 = vmatprep.subr.bf16.mxu0 0
        %570 = vmatpush1.bf16.msra.mxu0 0
        %571 = vmatprep.subr.bf16.mxu0 0
        %572 = vmatpush1.bf16.msra.mxu0 0
        %573 = vmatprep.subr.bf16.mxu0 0
        %574 = vmatpush1.bf16.msra.mxu0 0
        %575 = vmatprep.subr.bf16.mxu0 0
        %576 = vmatpush1.bf16.msra.mxu0 0
        %577 = vmatprep.subr.bf16.mxu0 0
        %578 = vmatpush1.bf16.msra.mxu0 0
        %579 = vmatprep.subr.bf16.mxu0 0
        %580 = vmatpush1.bf16.msra.mxu0 0
        %581 = vmatprep.subr.bf16.mxu0 0
        %582 = vmatpush1.bf16.msra.mxu0 0
        %583 = vmatprep.subr.bf16.mxu0 0
        %584 = vmatpush1.bf16.msra.mxu0 0
        %585 = vmatprep.subr.bf16.mxu0 0
        %586 = vmatpush1.bf16.msra.mxu0 0
        %587 = vmatprep.subr.bf16.mxu0 0
        %588 = vmatpush1.bf16.msra.mxu0 0
        %589 = vmatprep.mubr.bf16.mxu0 0
        %590 = vmatmul.mubr.bf16.gmra.mrb[0].mxu0 %v506
        %v591 = vpop.f32.mrb[0].mxu0
        %v592 = vadd.f32 0.0, %v591
        %v593 = vpop.f32.mrb[0].mxu0
        %v594 = vpop.f32.mrb[0].mxu0
        %v595 = vadd.f32 0.0, %v594
        %v596 = vpop.f32.mrb[0].mxu0
        %597 = vmatprep.mubr.bf16.mxu0 0
        %598 = vmatmul.mubr.bf16.gmra.mrb[0].mxu0 %v509
        %v599 = vpop.f32.mrb[0].mxu0
        %v600 = vadd.f32 0.0, %v599
        %v601 = vpop.f32.mrb[0].mxu0
        %v602 = vpop.f32.mrb[0].mxu0
        %v603 = vadd.f32 0.0, %v602
        %v604 = vpop.f32.mrb[0].mxu0
        %605 = vmatprep.mubr.bf16.mxu0 0
        %606 = vmatmul.mubr.bf16.gmra.mrb[0].mxu0 %v512
        %v607 = vpop.f32.mrb[0].mxu0
        %v608 = vadd.f32 0.0, %v607
        %v609 = vpop.f32.mrb[0].mxu0
        %v610 = vpop.f32.mrb[0].mxu0
        %v611 = vadd.f32 0.0, %v610
        %v612 = vpop.f32.mrb[0].mxu0
        %613 = vmatprep.mubr.bf16.mxu0 0
        %614 = vmatmul.mubr.bf16.gmra.mrb[0].mxu0 %v515
        %v615 = vpop.f32.mrb[0].mxu0
        %v616 = vadd.f32 0.0, %v615
        %v617 = vpop.f32.mrb[0].mxu0
        %v618 = vpop.f32.mrb[0].mxu0
        %v619 = vadd.f32 0.0, %v618
        %v620 = vpop.f32.mrb[0].mxu0
        %621 = vmatprep.mubr.bf16.mxu0 0
        %622 = vmatmul.mubr.bf16.gmra.mrb[0].mxu0 %v518
        %v623 = vpop.f32.mrb[0].mxu0
        %v624 = vadd.f32 0.0, %v623
        %v625 = vpop.f32.mrb[0].mxu0
        %v626 = vpop.f32.mrb[0].mxu0
        %v627 = vadd.f32 0.0, %v626
        %v628 = vpop.f32.mrb[0].mxu0
        %629 = vmatprep.mubr.bf16.mxu0 0
        %630 = vmatmul.mubr.bf16.gmra.mrb[0].mxu0 %v521
        %v631 = vpop.f32.mrb[0].mxu0
        %v632 = vadd.f32 0.0, %v631
        %v633 = vpop.f32.mrb[0].mxu0
        %v634 = vpop.f32.mrb[0].mxu0
        %v635 = vadd.f32 0.0, %v634
        %v636 = vpop.f32.mrb[0].mxu0
        %637 = vmatprep.mubr.bf16.mxu0 0
        %638 = vmatmul.mubr.bf16.gmra.mrb[0].mxu0 %v524
        %v639 = vpop.f32.mrb[0].mxu0
        %v640 = vadd.f32 0.0, %v639
        %v641 = vpop.f32.mrb[0].mxu0
        %v642 = vpop.f32.mrb[0].mxu0
        %v643 = vadd.f32 0.0, %v642
        %v644 = vpop.f32.mrb[0].mxu0
        %645 = vmatprep.mubr.bf16.mxu0 0
        %646 = vmatmul.mubr.bf16.gmra.mrb[0].mxu0 %v527
        %v647 = vpop.f32.mrb[0].mxu0
        %v648 = vadd.f32 0.0, %v647
        %v649 = vpop.f32.mrb[0].mxu0
        %v650 = vpop.f32.mrb[0].mxu0
        %v651 = vadd.f32 0.0, %v650
        %v652 = vpop.f32.mrb[0].mxu0
        %653 = vmatprep.mubr.bf16.mxu0 0
        %654 = vmatmul.mubr.bf16.gmra.mrb[0].mxu0 %v530
        %v655 = vpop.f32.mrb[0].mxu0
        %v656 = vadd.f32 0.0, %v655
        %v657 = vpop.f32.mrb[0].mxu0
        %v658 = vpop.f32.mrb[0].mxu0
        %v659 = vadd.f32 0.0, %v658
        %v660 = vpop.f32.mrb[0].mxu0
        %661 = vmatprep.mubr.bf16.mxu0 0
        %662 = vmatmul.mubr.bf16.gmra.mrb[0].mxu0 %v533
        %v663 = vpop.f32.mrb[0].mxu0
        %v664 = vadd.f32 0.0, %v663
        %v665 = vpop.f32.mrb[0].mxu0
        %v666 = vpop.f32.mrb[0].mxu0
        %v667 = vadd.f32 0.0, %v666
        %v668 = vpop.f32.mrb[0].mxu0
        %669 = vmatprep.mubr.bf16.mxu0 0
        %670 = vmatmul.mubr.bf16.gmra.mrb[0].mxu0 %v536
        %v671 = vpop.f32.mrb[0].mxu0
        %v672 = vadd.f32 0.0, %v671
        %v673 = vpop.f32.mrb[0].mxu0
        %v674 = vpop.f32.mrb[0].mxu0
        %v675 = vadd.f32 0.0, %v674
        %v676 = vpop.f32.mrb[0].mxu0
        %677 = vmatprep.mubr.bf16.mxu0 0
        %678 = vmatmul.mubr.bf16.gmra.mrb[0].mxu0 %v539
        %v679 = vpop.f32.mrb[0].mxu0
        %v680 = vadd.f32 0.0, %v679
        %v681 = vpop.f32.mrb[0].mxu0
        %v682 = vpop.f32.mrb[0].mxu0
        %v683 = vadd.f32 0.0, %v682
        %v684 = vpop.f32.mrb[0].mxu0
        %685 = vmatprep.mubr.bf16.mxu0 0
        %686 = vmatmul.mubr.bf16.gmra.mrb[0].mxu0 %v542
        %v687 = vpop.f32.mrb[0].mxu0
        %v688 = vadd.f32 0.0, %v687
        %v689 = vpop.f32.mrb[0].mxu0
        %v690 = vpop.f32.mrb[0].mxu0
        %v691 = vadd.f32 0.0, %v690
        %v692 = vpop.f32.mrb[0].mxu0
        %693 = vmatprep.mubr.bf16.mxu0 0
        %694 = vmatmul.mubr.bf16.gmra.mrb[0].mxu0 %v545
        %v695 = vpop.f32.mrb[0].mxu0
        %v696 = vadd.f32 0.0, %v695
        %v697 = vpop.f32.mrb[0].mxu0
        %v698 = vpop.f32.mrb[0].mxu0
        %v699 = vadd.f32 0.0, %v698
        %v700 = vpop.f32.mrb[0].mxu0
        %701 = vmatprep.mubr.bf16.mxu0 0
        %702 = vmatmul.mubr.bf16.gmra.mrb[0].mxu0 %v548
        %v703 = vpop.f32.mrb[0].mxu0
        %v704 = vadd.f32 0.0, %v703
        %v705 = vpop.f32.mrb[0].mxu0
        %v706 = vpop.f32.mrb[0].mxu0
        %v707 = vadd.f32 0.0, %v706
        %v708 = vpop.f32.mrb[0].mxu0
        %709 = vmatprep.mubr.bf16.mxu0 0
        %710 = vmatmul.mubr.bf16.gmra.mrb[0].mxu0 %v551
        %v711 = vpop.f32.mrb[0].mxu0
        %v712 = vadd.f32 0.0, %v711
        %v713 = vpop.f32.mrb[0].mxu0
        %v714 = vpop.f32.mrb[0].mxu0
        %v715 = vadd.f32 0.0, %v714
        %v716 = vpop.f32.mrb[0].mxu0
        %717 = vdwg.mxu0
        %v718 = vlaneseq
        %v719 = vshrl.u32 %v718, 7
        %v720 = vsub.s32 0, %v719
        %v721 = vrot.slane %v419, %v720
        %722 = vmatprep.subr.mxu0 0.0
        %723 = vmatpush1.msra.mxu0 %v592
        %724 = vmatprep.subr.mxu0 0.0
        %725 = vmatpush1.msra.mxu0 %v595
        %726 = vmatprep.subr.mxu0 0.0
        %727 = vmatpush1.msra.mxu0 %v600
        %728 = vmatprep.subr.mxu0 0.0
        %729 = vmatpush1.msra.mxu0 %v603
        %730 = vmatprep.subr.mxu0 0.0
        %731 = vmatpush1.msra.mxu0 %v608
        %732 = vmatprep.subr.mxu0 0.0
        %733 = vmatpush1.msra.mxu0 %v611
        %734 = vmatprep.subr.mxu0 0.0
        %735 = vmatpush1.msra.mxu0 %v616
        %736 = vmatprep.subr.mxu0 0.0
        %737 = vmatpush1.msra.mxu0 %v619
        %738 = vmatprep.subr.mxu0 0.0
        %739 = vmatpush1.msra.mxu0 %v624
        %740 = vmatprep.subr.mxu0 0.0
        %741 = vmatpush1.msra.mxu0 %v627
        %742 = vmatprep.subr.mxu0 0.0
        %743 = vmatpush1.msra.mxu0 %v632
        %744 = vmatprep.subr.mxu0 0.0
        %745 = vmatpush1.msra.mxu0 %v635
        %746 = vmatprep.subr.mxu0 0.0
        %747 = vmatpush1.msra.mxu0 %v640
        %748 = vmatprep.subr.mxu0 0.0
        %749 = vmatpush1.msra.mxu0 %v643
        %750 = vmatprep.subr.mxu0 0.0
        %751 = vmatpush1.msra.mxu0 %v648
        %752 = vmatprep.subr.mxu0 0.0
        %753 = vmatpush1.msra.mxu0 %v651
        %754 = vmatprep.subr.mxu0 0.0
        %755 = vmatpush1.msra.mxu0 %v656
        %756 = vmatprep.subr.mxu0 0.0
        %757 = vmatpush1.msra.mxu0 %v659
        %758 = vmatprep.subr.mxu0 0.0
        %759 = vmatpush1.msra.mxu0 %v664
        %760 = vmatprep.subr.mxu0 0.0
        %761 = vmatpush1.msra.mxu0 %v667
        %762 = vmatprep.subr.mxu0 0.0
        %763 = vmatpush1.msra.mxu0 %v672
        %764 = vmatprep.subr.mxu0 0.0
        %765 = vmatpush1.msra.mxu0 %v675
        %766 = vmatprep.subr.mxu0 0.0
        %767 = vmatpush1.msra.mxu0 %v680
        %768 = vmatprep.subr.mxu0 0.0
        %769 = vmatpush1.msra.mxu0 %v683
        %770 = vmatprep.subr.mxu0 0.0
        %771 = vmatpush1.msra.mxu0 %v688
        %772 = vmatprep.subr.mxu0 0.0
        %773 = vmatpush1.msra.mxu0 %v691
        %774 = vmatprep.subr.mxu0 0.0
        %775 = vmatpush1.msra.mxu0 %v696
        %776 = vmatprep.subr.mxu0 0.0
        %777 = vmatpush1.msra.mxu0 %v699
        %778 = vmatprep.subr.mxu0 0.0
        %779 = vmatpush1.msra.mxu0 %v704
        %780 = vmatprep.subr.mxu0 0.0
        %781 = vmatpush1.msra.mxu0 %v707
        %782 = vmatprep.subr.mxu0 0.0
        %783 = vmatpush1.msra.mxu0 %v712
        %784 = vmatprep.subr.mxu0 0.0
        %785 = vmatpush1.msra.mxu0 %v715
        %786 = vmatprep.mubr.f32.mxu0 %v324
        %787 = vmatmul.mubr.f32.gmra.mrb[0].mxu0 %v323
        %v788 = vpop.f32.mrb[0].mxu0
        %v789 = vadd.f32 %v721, %v788
        %v790 = vpop.f32.mrb[0].mxu0
        %791 = vmatprep.mubr.f32.mxu0 %v326
        %792 = vmatmul.mubr.f32.gmra.mrb[0].mxu0 %v325
        %v793 = vpop.f32.mrb[0].mxu0
        %v794 = vadd.f32 %v721, %v793
        %v795 = vpop.f32.mrb[0].mxu0
        %796 = vmatprep.mubr.f32.mxu0 %v328
        %797 = vmatmul.mubr.f32.gmra.mrb[0].mxu0 %v327
        %v798 = vpop.f32.mrb[0].mxu0
        %v799 = vadd.f32 %v721, %v798
        %v800 = vpop.f32.mrb[0].mxu0
        %801 = vmatprep.mubr.f32.mxu0 %v330
        %802 = vmatmul.mubr.f32.gmra.mrb[0].mxu0 %v329
        %v803 = vpop.f32.mrb[0].mxu0
        %v804 = vadd.f32 %v721, %v803
        %v805 = vpop.f32.mrb[0].mxu0
        %806 = vmatprep.mubr.f32.mxu0 %v332
        %807 = vmatmul.mubr.f32.gmra.mrb[0].mxu0 %v331
        %v808 = vpop.f32.mrb[0].mxu0
        %v809 = vadd.f32 %v721, %v808
        %v810 = vpop.f32.mrb[0].mxu0
        %811 = vmatprep.mubr.f32.mxu0 %v334
        %812 = vmatmul.mubr.f32.gmra.mrb[0].mxu0 %v333
        %v813 = vpop.f32.mrb[0].mxu0
        %v814 = vadd.f32 %v721, %v813
        %v815 = vpop.f32.mrb[0].mxu0
        %816 = vmatprep.mubr.f32.mxu0 %v336
        %817 = vmatmul.mubr.f32.gmra.mrb[0].mxu0 %v335
        %v818 = vpop.f32.mrb[0].mxu0
        %v819 = vadd.f32 %v721, %v818
        %v820 = vpop.f32.mrb[0].mxu0
        %821 = vmatprep.mubr.f32.mxu0 %v338
        %822 = vmatmul.mubr.f32.gmra.mrb[0].mxu0 %v337
        %v823 = vpop.f32.mrb[0].mxu0
        %v824 = vadd.f32 %v721, %v823
        %v825 = vpop.f32.mrb[0].mxu0
        %826 = vmatprep.mubr.f32.mxu0 %v340
        %827 = vmatmul.mubr.f32.gmra.mrb[0].mxu0 %v339
        %v828 = vpop.f32.mrb[0].mxu0
        %v829 = vadd.f32 %v721, %v828
        %v830 = vpop.f32.mrb[0].mxu0
        %831 = vmatprep.mubr.f32.mxu0 %v342
        %832 = vmatmul.mubr.f32.gmra.mrb[0].mxu0 %v341
        %v833 = vpop.f32.mrb[0].mxu0
        %v834 = vadd.f32 %v721, %v833
        %v835 = vpop.f32.mrb[0].mxu0
        %836 = vmatprep.mubr.f32.mxu0 %v344
        %837 = vmatmul.mubr.f32.gmra.mrb[0].mxu0 %v343
        %v838 = vpop.f32.mrb[0].mxu0
        %v839 = vadd.f32 %v721, %v838
        %v840 = vpop.f32.mrb[0].mxu0
        %841 = vmatprep.mubr.f32.mxu0 %v346
        %842 = vmatmul.mubr.f32.gmra.mrb[0].mxu0 %v345
        %v843 = vpop.f32.mrb[0].mxu0
        %v844 = vadd.f32 %v721, %v843
        %v845 = vpop.f32.mrb[0].mxu0
        %846 = vmatprep.mubr.f32.mxu0 %v348
        %847 = vmatmul.mubr.f32.gmra.mrb[0].mxu0 %v347
        %v848 = vpop.f32.mrb[0].mxu0
        %v849 = vadd.f32 %v721, %v848
        %v850 = vpop.f32.mrb[0].mxu0
        %851 = vmatprep.mubr.f32.mxu0 %v350
        %852 = vmatmul.mubr.f32.gmra.mrb[0].mxu0 %v349
        %v853 = vpop.f32.mrb[0].mxu0
        %v854 = vadd.f32 %v721, %v853
        %v855 = vpop.f32.mrb[0].mxu0
        %856 = vmatprep.mubr.f32.mxu0 %v352
        %857 = vmatmul.mubr.f32.gmra.mrb[0].mxu0 %v351
        %v858 = vpop.f32.mrb[0].mxu0
        %v859 = vadd.f32 %v721, %v858
        %v860 = vpop.f32.mrb[0].mxu0
        %861 = vmatprep.mubr.f32.mxu0 %v354
        %862 = vmatmul.mubr.f32.gmra.mrb[0].mxu0 %v353
        %v863 = vpop.f32.mrb[0].mxu0
        %v864 = vadd.f32 %v721, %v863
        %v865 = vpop.f32.mrb[0].mxu0
        %866 = vmatprep.mubr.f32.mxu0 %v356
        %867 = vmatmul.mubr.f32.gmra.mrb[0].mxu0 %v355
        %v868 = vpop.f32.mrb[0].mxu0
        %v869 = vadd.f32 %v721, %v868
        %v870 = vpop.f32.mrb[0].mxu0
        %871 = vmatprep.mubr.f32.mxu0 %v358
        %872 = vmatmul.mubr.f32.gmra.mrb[0].mxu0 %v357
        %v873 = vpop.f32.mrb[0].mxu0
        %v874 = vadd.f32 %v721, %v873
        %v875 = vpop.f32.mrb[0].mxu0
        %876 = vmatprep.mubr.f32.mxu0 %v360
        %877 = vmatmul.mubr.f32.gmra.mrb[0].mxu0 %v359
        %v878 = vpop.f32.mrb[0].mxu0
        %v879 = vadd.f32 %v721, %v878
        %v880 = vpop.f32.mrb[0].mxu0
        %881 = vmatprep.mubr.f32.mxu0 %v362
        %882 = vmatmul.mubr.f32.gmra.mrb[0].mxu0 %v361
        %v883 = vpop.f32.mrb[0].mxu0
        %v884 = vadd.f32 %v721, %v883
        %v885 = vpop.f32.mrb[0].mxu0
        %886 = vmatprep.mubr.f32.mxu0 %v364
        %887 = vmatmul.mubr.f32.gmra.mrb[0].mxu0 %v363
        %v888 = vpop.f32.mrb[0].mxu0
        %v889 = vadd.f32 %v721, %v888
        %v890 = vpop.f32.mrb[0].mxu0
        %891 = vmatprep.mubr.f32.mxu0 %v366
        %892 = vmatmul.mubr.f32.gmra.mrb[0].mxu0 %v365
        %v893 = vpop.f32.mrb[0].mxu0
        %v894 = vadd.f32 %v721, %v893
        %v895 = vpop.f32.mrb[0].mxu0
        %896 = vmatprep.mubr.f32.mxu0 %v368
        %897 = vmatmul.mubr.f32.gmra.mrb[0].mxu0 %v367
        %v898 = vpop.f32.mrb[0].mxu0
        %v899 = vadd.f32 %v721, %v898
        %v900 = vpop.f32.mrb[0].mxu0
        %901 = vmatprep.mubr.f32.mxu0 %v370
        %902 = vmatmul.mubr.f32.gmra.mrb[0].mxu0 %v369
        %v903 = vpop.f32.mrb[0].mxu0
        %v904 = vadd.f32 %v721, %v903
        %v905 = vpop.f32.mrb[0].mxu0
        %906 = vmatprep.mubr.f32.mxu0 %v372
        %907 = vmatmul.mubr.f32.gmra.mrb[0].mxu0 %v371
        %v908 = vpop.f32.mrb[0].mxu0
        %v909 = vadd.f32 %v721, %v908
        %v910 = vpop.f32.mrb[0].mxu0
        %911 = vmatprep.mubr.f32.mxu0 %v374
        %912 = vmatmul.mubr.f32.gmra.mrb[0].mxu0 %v373
        %v913 = vpop.f32.mrb[0].mxu0
        %v914 = vadd.f32 %v721, %v913
        %v915 = vpop.f32.mrb[0].mxu0
        %916 = vmatprep.mubr.f32.mxu0 %v376
        %917 = vmatmul.mubr.f32.gmra.mrb[0].mxu0 %v375
        %v918 = vpop.f32.mrb[0].mxu0
        %v919 = vadd.f32 %v721, %v918
        %v920 = vpop.f32.mrb[0].mxu0
        %921 = vmatprep.mubr.f32.mxu0 %v378
        %922 = vmatmul.mubr.f32.gmra.mrb[0].mxu0 %v377
        %v923 = vpop.f32.mrb[0].mxu0
        %v924 = vadd.f32 %v721, %v923
        %v925 = vpop.f32.mrb[0].mxu0
        %926 = vmatprep.mubr.f32.mxu0 %v380
        %927 = vmatmul.mubr.f32.gmra.mrb[0].mxu0 %v379
        %v928 = vpop.f32.mrb[0].mxu0
        %v929 = vadd.f32 %v721, %v928
        %v930 = vpop.f32.mrb[0].mxu0
        %931 = vmatprep.mubr.f32.mxu0 %v382
        %932 = vmatmul.mubr.f32.gmra.mrb[0].mxu0 %v381
        %v933 = vpop.f32.mrb[0].mxu0
        %v934 = vadd.f32 %v721, %v933
        %v935 = vpop.f32.mrb[0].mxu0
        %936 = vmatprep.mubr.f32.mxu0 %v384
        %937 = vmatmul.mubr.f32.gmra.mrb[0].mxu0 %v383
        %v938 = vpop.f32.mrb[0].mxu0
        %v939 = vadd.f32 %v721, %v938
        %v940 = vpop.f32.mrb[0].mxu0
        %941 = vmatprep.mubr.f32.mxu0 %v386
        %942 = vmatmul.mubr.f32.gmra.mrb[0].mxu0 %v385
        %v943 = vpop.f32.mrb[0].mxu0
        %v944 = vadd.f32 %v721, %v943
        %v945 = vpop.f32.mrb[0].mxu0
        %946 = vdwg.mxu0
        %v947 = vmax.f32 %v789, 0.0
        %v948 = vmax.f32 %v794, 0.0
        %v949 = vmax.f32 %v799, 0.0
        %v950 = vmax.f32 %v804, 0.0
        %v951 = vmax.f32 %v809, 0.0
        %v952 = vmax.f32 %v814, 0.0
        %v953 = vmax.f32 %v819, 0.0
        %v954 = vmax.f32 %v824, 0.0
        %v955 = vmax.f32 %v829, 0.0
        %v956 = vmax.f32 %v834, 0.0
        %v957 = vmax.f32 %v839, 0.0
        %v958 = vmax.f32 %v844, 0.0
        %v959 = vmax.f32 %v849, 0.0
        %v960 = vmax.f32 %v854, 0.0
        %v961 = vmax.f32 %v859, 0.0
        %v962 = vmax.f32 %v864, 0.0
        %v963 = vmax.f32 %v869, 0.0
        %v964 = vmax.f32 %v874, 0.0
        %v965 = vmax.f32 %v879, 0.0
        %v966 = vmax.f32 %v884, 0.0
        %v967 = vmax.f32 %v889, 0.0
        %v968 = vmax.f32 %v894, 0.0
        %v969 = vmax.f32 %v899, 0.0
        %v970 = vmax.f32 %v904, 0.0
        %v971 = vmax.f32 %v909, 0.0
        %v972 = vmax.f32 %v914, 0.0
        %v973 = vmax.f32 %v919, 0.0
        %v974 = vmax.f32 %v924, 0.0
        %v975 = vmax.f32 %v929, 0.0
        %v976 = vmax.f32 %v934, 0.0
        %v977 = vmax.f32 %v939, 0.0
        %v978 = vmax.f32 %v944, 0.0
        %v979 = vpack.c.bf16 %v948, %v947
        %v980 = vpack.c.bf16 %v950, %v949
        %v981 = vpack.c.bf16 %v952, %v951
        %v982 = vpack.c.bf16 %v954, %v953
        %v983 = vpack.c.bf16 %v956, %v955
        %v984 = vpack.c.bf16 %v958, %v957
        %v985 = vpack.c.bf16 %v960, %v959
        %v986 = vpack.c.bf16 %v962, %v961
        %v987 = vpack.c.bf16 %v964, %v963
        %v988 = vpack.c.bf16 %v966, %v965
        %v989 = vpack.c.bf16 %v968, %v967
        %v990 = vpack.c.bf16 %v970, %v969
        %v991 = vpack.c.bf16 %v972, %v971
        %v992 = vpack.c.bf16 %v974, %v973
        %v993 = vpack.c.bf16 %v976, %v975
        %v994 = vpack.c.bf16 %v978, %v977
        %v995 = vld [vmem:[%s3] sm:$0xf]
        %v996 = vld [vmem:[%s3 + $0x4] sm:$0xf]
        %v997 = vld [vmem:[%s3 + $0x8] sm:$0xf]
        %v998 = vld [vmem:[%s3 + $0xc] sm:$0xf]
        %v1003 = vunpack.c.l.b16 %v995
        %v1004 = vunpack.c.l.b16 %v996
        %v1005 = vunpack.c.l.b16 %v997
        %v1006 = vunpack.c.l.b16 %v998
        %v1007 = vpack.c.b16 %v1004, %v1003
        %v1008 = vpack.c.b16 %v1006, %v1005
        %vm1011 = vcmask 261120
        %v1013 = vsel %vm1011, %v979, 0
        %v1016 = vsel %vm1011, %v980, 0
        %v1019 = vsel %vm1011, %v981, 0
        %v1022 = vsel %vm1011, %v982, 0
        %v1025 = vsel %vm1011, %v983, 0
        %v1028 = vsel %vm1011, %v984, 0
        %v1031 = vsel %vm1011, %v985, 0
        %v1034 = vsel %vm1011, %v986, 0
        %v1037 = vsel %vm1011, %v987, 0
        %v1040 = vsel %vm1011, %v988, 0
        %v1043 = vsel %vm1011, %v989, 0
        %v1046 = vsel %vm1011, %v990, 0
        %v1049 = vsel %vm1011, %v991, 0
        %v1052 = vsel %vm1011, %v992, 0
        %v1055 = vsel %vm1011, %v993, 0
        %v1058 = vsel %vm1011, %v994, 0
        %1060 = vmatprep.subr.bf16.mxu0 0
        %1061 = vmatpush1.bf16.msra.mxu0 %v1007
        %1062 = vmatprep.subr.bf16.mxu0 0
        %1063 = vmatpush1.bf16.msra.mxu0 %v1008
        %1064 = vmatprep.subr.bf16.mxu0 0
        %1065 = vmatpush1.bf16.msra.mxu0 0
        %1066 = vmatprep.subr.bf16.mxu0 0
        %1067 = vmatpush1.bf16.msra.mxu0 0
        %1068 = vmatprep.subr.bf16.mxu0 0
        %1069 = vmatpush1.bf16.msra.mxu0 0
        %1070 = vmatprep.subr.bf16.mxu0 0
        %1071 = vmatpush1.bf16.msra.mxu0 0
        %1072 = vmatprep.subr.bf16.mxu0 0
        %1073 = vmatpush1.bf16.msra.mxu0 0
        %1074 = vmatprep.subr.bf16.mxu0 0
        %1075 = vmatpush1.bf16.msra.mxu0 0
        %1076 = vmatprep.subr.bf16.mxu0 0
        %1077 = vmatpush1.bf16.msra.mxu0 0
        %1078 = vmatprep.subr.bf16.mxu0 0
        %1079 = vmatpush1.bf16.msra.mxu0 0
        %1080 = vmatprep.subr.bf16.mxu0 0
        %1081 = vmatpush1.bf16.msra.mxu0 0
        %1082 = vmatprep.subr.bf16.mxu0 0
        %1083 = vmatpush1.bf16.msra.mxu0 0
        %1084 = vmatprep.subr.bf16.mxu0 0
        %1085 = vmatpush1.bf16.msra.mxu0 0
        %1086 = vmatprep.subr.bf16.mxu0 0
        %1087 = vmatpush1.bf16.msra.mxu0 0
        %1088 = vmatprep.subr.bf16.mxu0 0
        %1089 = vmatpush1.bf16.msra.mxu0 0
        %1090 = vmatprep.subr.bf16.mxu0 0
        %1091 = vmatpush1.bf16.msra.mxu0 0
        %1092 = vmatprep.mubr.bf16.mxu0 0
        %1093 = vmatmul.mubr.bf16.gmra.mrb[0].mxu0 %v1013
        %v1094 = vpop.f32.mrb[0].mxu0
        %v1095 = vadd.f32 0.0, %v1094
        %v1096 = vpop.f32.mrb[0].mxu0
        %v1097 = vpop.f32.mrb[0].mxu0
        %v1098 = vadd.f32 0.0, %v1097
        %v1099 = vpop.f32.mrb[0].mxu0
        %1100 = vmatprep.mubr.bf16.mxu0 0
        %1101 = vmatmul.mubr.bf16.gmra.mrb[0].mxu0 %v1016
        %v1102 = vpop.f32.mrb[0].mxu0
        %v1103 = vadd.f32 0.0, %v1102
        %v1104 = vpop.f32.mrb[0].mxu0
        %v1105 = vpop.f32.mrb[0].mxu0
        %v1106 = vadd.f32 0.0, %v1105
        %v1107 = vpop.f32.mrb[0].mxu0
        %1108 = vmatprep.mubr.bf16.mxu0 0
        %1109 = vmatmul.mubr.bf16.gmra.mrb[0].mxu0 %v1019
        %v1110 = vpop.f32.mrb[0].mxu0
        %v1111 = vadd.f32 0.0, %v1110
        %v1112 = vpop.f32.mrb[0].mxu0
        %v1113 = vpop.f32.mrb[0].mxu0
        %v1114 = vadd.f32 0.0, %v1113
        %v1115 = vpop.f32.mrb[0].mxu0
        %1116 = vmatprep.mubr.bf16.mxu0 0
        %1117 = vmatmul.mubr.bf16.gmra.mrb[0].mxu0 %v1022
        %v1118 = vpop.f32.mrb[0].mxu0
        %v1119 = vadd.f32 0.0, %v1118
        %v1120 = vpop.f32.mrb[0].mxu0
        %v1121 = vpop.f32.mrb[0].mxu0
        %v1122 = vadd.f32 0.0, %v1121
        %v1123 = vpop.f32.mrb[0].mxu0
        %1124 = vmatprep.mubr.bf16.mxu0 0
        %1125 = vmatmul.mubr.bf16.gmra.mrb[0].mxu0 %v1025
        %v1126 = vpop.f32.mrb[0].mxu0
        %v1127 = vadd.f32 0.0, %v1126
        %v1128 = vpop.f32.mrb[0].mxu0
        %v1129 = vpop.f32.mrb[0].mxu0
        %v1130 = vadd.f32 0.0, %v1129
        %v1131 = vpop.f32.mrb[0].mxu0
        %1132 = vmatprep.mubr.bf16.mxu0 0
        %1133 = vmatmul.mubr.bf16.gmra.mrb[0].mxu0 %v1028
        %v1134 = vpop.f32.mrb[0].mxu0
        %v1135 = vadd.f32 0.0, %v1134
        %v1136 = vpop.f32.mrb[0].mxu0
        %v1137 = vpop.f32.mrb[0].mxu0
        %v1138 = vadd.f32 0.0, %v1137
        %v1139 = vpop.f32.mrb[0].mxu0
        %1140 = vmatprep.mubr.bf16.mxu0 0
        %1141 = vmatmul.mubr.bf16.gmra.mrb[0].mxu0 %v1031
        %v1142 = vpop.f32.mrb[0].mxu0
        %v1143 = vadd.f32 0.0, %v1142
        %v1144 = vpop.f32.mrb[0].mxu0
        %v1145 = vpop.f32.mrb[0].mxu0
        %v1146 = vadd.f32 0.0, %v1145
        %v1147 = vpop.f32.mrb[0].mxu0
        %1148 = vmatprep.mubr.bf16.mxu0 0
        %1149 = vmatmul.mubr.bf16.gmra.mrb[0].mxu0 %v1034
        %v1150 = vpop.f32.mrb[0].mxu0
        %v1151 = vadd.f32 0.0, %v1150
        %v1152 = vpop.f32.mrb[0].mxu0
        %v1153 = vpop.f32.mrb[0].mxu0
        %v1154 = vadd.f32 0.0, %v1153
        %v1155 = vpop.f32.mrb[0].mxu0
        %1156 = vmatprep.mubr.bf16.mxu0 0
        %1157 = vmatmul.mubr.bf16.gmra.mrb[0].mxu0 %v1037
        %v1158 = vpop.f32.mrb[0].mxu0
        %v1159 = vadd.f32 0.0, %v1158
        %v1160 = vpop.f32.mrb[0].mxu0
        %v1161 = vpop.f32.mrb[0].mxu0
        %v1162 = vadd.f32 0.0, %v1161
        %v1163 = vpop.f32.mrb[0].mxu0
        %1164 = vmatprep.mubr.bf16.mxu0 0
        %1165 = vmatmul.mubr.bf16.gmra.mrb[0].mxu0 %v1040
        %v1166 = vpop.f32.mrb[0].mxu0
        %v1167 = vadd.f32 0.0, %v1166
        %v1168 = vpop.f32.mrb[0].mxu0
        %v1169 = vpop.f32.mrb[0].mxu0
        %v1170 = vadd.f32 0.0, %v1169
        %v1171 = vpop.f32.mrb[0].mxu0
        %1172 = vmatprep.mubr.bf16.mxu0 0
        %1173 = vmatmul.mubr.bf16.gmra.mrb[0].mxu0 %v1043
        %v1174 = vpop.f32.mrb[0].mxu0
        %v1175 = vadd.f32 0.0, %v1174
        %v1176 = vpop.f32.mrb[0].mxu0
        %v1177 = vpop.f32.mrb[0].mxu0
        %v1178 = vadd.f32 0.0, %v1177
        %v1179 = vpop.f32.mrb[0].mxu0
        %1180 = vmatprep.mubr.bf16.mxu0 0
        %1181 = vmatmul.mubr.bf16.gmra.mrb[0].mxu0 %v1046
        %v1182 = vpop.f32.mrb[0].mxu0
        %v1183 = vadd.f32 0.0, %v1182
        %v1184 = vpop.f32.mrb[0].mxu0
        %v1185 = vpop.f32.mrb[0].mxu0
        %v1186 = vadd.f32 0.0, %v1185
        %v1187 = vpop.f32.mrb[0].mxu0
        %1188 = vmatprep.mubr.bf16.mxu0 0
        %1189 = vmatmul.mubr.bf16.gmra.mrb[0].mxu0 %v1049
        %v1190 = vpop.f32.mrb[0].mxu0
        %v1191 = vadd.f32 0.0, %v1190
        %v1192 = vpop.f32.mrb[0].mxu0
        %v1193 = vpop.f32.mrb[0].mxu0
        %v1194 = vadd.f32 0.0, %v1193
        %v1195 = vpop.f32.mrb[0].mxu0
        %1196 = vmatprep.mubr.bf16.mxu0 0
        %1197 = vmatmul.mubr.bf16.gmra.mrb[0].mxu0 %v1052
        %v1198 = vpop.f32.mrb[0].mxu0
        %v1199 = vadd.f32 0.0, %v1198
        %v1200 = vpop.f32.mrb[0].mxu0
        %v1201 = vpop.f32.mrb[0].mxu0
        %v1202 = vadd.f32 0.0, %v1201
        %v1203 = vpop.f32.mrb[0].mxu0
        %1204 = vmatprep.mubr.bf16.mxu0 0
        %1205 = vmatmul.mubr.bf16.gmra.mrb[0].mxu0 %v1055
        %v1206 = vpop.f32.mrb[0].mxu0
        %v1207 = vadd.f32 0.0, %v1206
        %v1208 = vpop.f32.mrb[0].mxu0
        %v1209 = vpop.f32.mrb[0].mxu0
        %v1210 = vadd.f32 0.0, %v1209
        %v1211 = vpop.f32.mrb[0].mxu0
        %1212 = vmatprep.mubr.bf16.mxu0 0
        %1213 = vmatmul.mubr.bf16.gmra.mrb[0].mxu0 %v1058
        %v1214 = vpop.f32.mrb[0].mxu0
        %v1215 = vadd.f32 0.0, %v1214
        %v1216 = vpop.f32.mrb[0].mxu0
        %v1217 = vpop.f32.mrb[0].mxu0
        %v1218 = vadd.f32 0.0, %v1217
        %v1219 = vpop.f32.mrb[0].mxu0
        %1220 = vdwg.mxu0
        %v1221 = vlaneseq
        %v1222 = vshrl.u32 %v1221, 7
        %v1223 = vsub.s32 0, %v1222
        %v1224 = vrot.slane %v420, %v1223
        %1225 = vmatprep.subr.mxu0 0.0
        %1226 = vmatpush1.msra.mxu0 %v1095
        %1227 = vmatprep.subr.mxu0 0.0
        %1228 = vmatpush1.msra.mxu0 %v1098
        %1229 = vmatprep.subr.mxu0 0.0
        %1230 = vmatpush1.msra.mxu0 %v1103
        %1231 = vmatprep.subr.mxu0 0.0
        %1232 = vmatpush1.msra.mxu0 %v1106
        %1233 = vmatprep.subr.mxu0 0.0
        %1234 = vmatpush1.msra.mxu0 %v1111
        %1235 = vmatprep.subr.mxu0 0.0
        %1236 = vmatpush1.msra.mxu0 %v1114
        %1237 = vmatprep.subr.mxu0 0.0
        %1238 = vmatpush1.msra.mxu0 %v1119
        %1239 = vmatprep.subr.mxu0 0.0
        %1240 = vmatpush1.msra.mxu0 %v1122
        %1241 = vmatprep.subr.mxu0 0.0
        %1242 = vmatpush1.msra.mxu0 %v1127
        %1243 = vmatprep.subr.mxu0 0.0
        %1244 = vmatpush1.msra.mxu0 %v1130
        %1245 = vmatprep.subr.mxu0 0.0
        %1246 = vmatpush1.msra.mxu0 %v1135
        %1247 = vmatprep.subr.mxu0 0.0
        %1248 = vmatpush1.msra.mxu0 %v1138
        %1249 = vmatprep.subr.mxu0 0.0
        %1250 = vmatpush1.msra.mxu0 %v1143
        %1251 = vmatprep.subr.mxu0 0.0
        %1252 = vmatpush1.msra.mxu0 %v1146
        %1253 = vmatprep.subr.mxu0 0.0
        %1254 = vmatpush1.msra.mxu0 %v1151
        %1255 = vmatprep.subr.mxu0 0.0
        %1256 = vmatpush1.msra.mxu0 %v1154
        %1257 = vmatprep.subr.mxu0 0.0
        %1258 = vmatpush1.msra.mxu0 %v1159
        %1259 = vmatprep.subr.mxu0 0.0
        %1260 = vmatpush1.msra.mxu0 %v1162
        %1261 = vmatprep.subr.mxu0 0.0
        %1262 = vmatpush1.msra.mxu0 %v1167
        %1263 = vmatprep.subr.mxu0 0.0
        %1264 = vmatpush1.msra.mxu0 %v1170
        %1265 = vmatprep.subr.mxu0 0.0
        %1266 = vmatpush1.msra.mxu0 %v1175
        %1267 = vmatprep.subr.mxu0 0.0
        %1268 = vmatpush1.msra.mxu0 %v1178
        %1269 = vmatprep.subr.mxu0 0.0
        %1270 = vmatpush1.msra.mxu0 %v1183
        %1271 = vmatprep.subr.mxu0 0.0
        %1272 = vmatpush1.msra.mxu0 %v1186
        %1273 = vmatprep.subr.mxu0 0.0
        %1274 = vmatpush1.msra.mxu0 %v1191
        %1275 = vmatprep.subr.mxu0 0.0
        %1276 = vmatpush1.msra.mxu0 %v1194
        %1277 = vmatprep.subr.mxu0 0.0
        %1278 = vmatpush1.msra.mxu0 %v1199
        %1279 = vmatprep.subr.mxu0 0.0
        %1280 = vmatpush1.msra.mxu0 %v1202
        %1281 = vmatprep.subr.mxu0 0.0
        %1282 = vmatpush1.msra.mxu0 %v1207
        %1283 = vmatprep.subr.mxu0 0.0
        %1284 = vmatpush1.msra.mxu0 %v1210
        %1285 = vmatprep.subr.mxu0 0.0
        %1286 = vmatpush1.msra.mxu0 %v1215
        %1287 = vmatprep.subr.mxu0 0.0
        %1288 = vmatpush1.msra.mxu0 %v1218
        %1289 = vmatprep.mubr.f32.mxu0 %v324
        %1290 = vmatmul.mubr.f32.gmra.mrb[0].mxu0 %v323
        %v1291 = vpop.f32.mrb[0].mxu0
        %v1292 = vadd.f32 %v1224, %v1291
        %v1293 = vpop.f32.mrb[0].mxu0
        %1294 = vmatprep.mubr.f32.mxu0 %v326
        %1295 = vmatmul.mubr.f32.gmra.mrb[0].mxu0 %v325
        %v1296 = vpop.f32.mrb[0].mxu0
        %v1297 = vadd.f32 %v1224, %v1296
        %v1298 = vpop.f32.mrb[0].mxu0
        %1299 = vmatprep.mubr.f32.mxu0 %v328
        %1300 = vmatmul.mubr.f32.gmra.mrb[0].mxu0 %v327
        %v1301 = vpop.f32.mrb[0].mxu0
        %v1302 = vadd.f32 %v1224, %v1301
        %v1303 = vpop.f32.mrb[0].mxu0
        %1304 = vmatprep.mubr.f32.mxu0 %v330
        %1305 = vmatmul.mubr.f32.gmra.mrb[0].mxu0 %v329
        %v1306 = vpop.f32.mrb[0].mxu0
        %v1307 = vadd.f32 %v1224, %v1306
        %v1308 = vpop.f32.mrb[0].mxu0
        %1309 = vmatprep.mubr.f32.mxu0 %v332
        %1310 = vmatmul.mubr.f32.gmra.mrb[0].mxu0 %v331
        %v1311 = vpop.f32.mrb[0].mxu0
        %v1312 = vadd.f32 %v1224, %v1311
        %v1313 = vpop.f32.mrb[0].mxu0
        %1314 = vmatprep.mubr.f32.mxu0 %v334
        %1315 = vmatmul.mubr.f32.gmra.mrb[0].mxu0 %v333
        %v1316 = vpop.f32.mrb[0].mxu0
        %v1317 = vadd.f32 %v1224, %v1316
        %v1318 = vpop.f32.mrb[0].mxu0
        %1319 = vmatprep.mubr.f32.mxu0 %v336
        %1320 = vmatmul.mubr.f32.gmra.mrb[0].mxu0 %v335
        %v1321 = vpop.f32.mrb[0].mxu0
        %v1322 = vadd.f32 %v1224, %v1321
        %v1323 = vpop.f32.mrb[0].mxu0
        %1324 = vmatprep.mubr.f32.mxu0 %v338
        %1325 = vmatmul.mubr.f32.gmra.mrb[0].mxu0 %v337
        %v1326 = vpop.f32.mrb[0].mxu0
        %v1327 = vadd.f32 %v1224, %v1326
        %v1328 = vpop.f32.mrb[0].mxu0
        %1329 = vmatprep.mubr.f32.mxu0 %v340
        %1330 = vmatmul.mubr.f32.gmra.mrb[0].mxu0 %v339
        %v1331 = vpop.f32.mrb[0].mxu0
        %v1332 = vadd.f32 %v1224, %v1331
        %v1333 = vpop.f32.mrb[0].mxu0
        %1334 = vmatprep.mubr.f32.mxu0 %v342
        %1335 = vmatmul.mubr.f32.gmra.mrb[0].mxu0 %v341
        %v1336 = vpop.f32.mrb[0].mxu0
        %v1337 = vadd.f32 %v1224, %v1336
        %v1338 = vpop.f32.mrb[0].mxu0
        %1339 = vmatprep.mubr.f32.mxu0 %v344
        %1340 = vmatmul.mubr.f32.gmra.mrb[0].mxu0 %v343
        %v1341 = vpop.f32.mrb[0].mxu0
        %v1342 = vadd.f32 %v1224, %v1341
        %v1343 = vpop.f32.mrb[0].mxu0
        %1344 = vmatprep.mubr.f32.mxu0 %v346
        %1345 = vmatmul.mubr.f32.gmra.mrb[0].mxu0 %v345
        %v1346 = vpop.f32.mrb[0].mxu0
        %v1347 = vadd.f32 %v1224, %v1346
        %v1348 = vpop.f32.mrb[0].mxu0
        %1349 = vmatprep.mubr.f32.mxu0 %v348
        %1350 = vmatmul.mubr.f32.gmra.mrb[0].mxu0 %v347
        %v1351 = vpop.f32.mrb[0].mxu0
        %v1352 = vadd.f32 %v1224, %v1351
        %v1353 = vpop.f32.mrb[0].mxu0
        %1354 = vmatprep.mubr.f32.mxu0 %v350
        %1355 = vmatmul.mubr.f32.gmra.mrb[0].mxu0 %v349
        %v1356 = vpop.f32.mrb[0].mxu0
        %v1357 = vadd.f32 %v1224, %v1356
        %v1358 = vpop.f32.mrb[0].mxu0
        %1359 = vmatprep.mubr.f32.mxu0 %v352
        %1360 = vmatmul.mubr.f32.gmra.mrb[0].mxu0 %v351
        %v1361 = vpop.f32.mrb[0].mxu0
        %v1362 = vadd.f32 %v1224, %v1361
        %v1363 = vpop.f32.mrb[0].mxu0
        %1364 = vmatprep.mubr.f32.mxu0 %v354
        %1365 = vmatmul.mubr.f32.gmra.mrb[0].mxu0 %v353
        %v1366 = vpop.f32.mrb[0].mxu0
        %v1367 = vadd.f32 %v1224, %v1366
        %v1368 = vpop.f32.mrb[0].mxu0
        %1369 = vmatprep.mubr.f32.mxu0 %v356
        %1370 = vmatmul.mubr.f32.gmra.mrb[0].mxu0 %v355
        %v1371 = vpop.f32.mrb[0].mxu0
        %v1372 = vadd.f32 %v1224, %v1371
        %v1373 = vpop.f32.mrb[0].mxu0
        %1374 = vmatprep.mubr.f32.mxu0 %v358
        %1375 = vmatmul.mubr.f32.gmra.mrb[0].mxu0 %v357
        %v1376 = vpop.f32.mrb[0].mxu0
        %v1377 = vadd.f32 %v1224, %v1376
        %v1378 = vpop.f32.mrb[0].mxu0
        %1379 = vmatprep.mubr.f32.mxu0 %v360
        %1380 = vmatmul.mubr.f32.gmra.mrb[0].mxu0 %v359
        %v1381 = vpop.f32.mrb[0].mxu0
        %v1382 = vadd.f32 %v1224, %v1381
        %v1383 = vpop.f32.mrb[0].mxu0
        %1384 = vmatprep.mubr.f32.mxu0 %v362
        %1385 = vmatmul.mubr.f32.gmra.mrb[0].mxu0 %v361
        %v1386 = vpop.f32.mrb[0].mxu0
        %v1387 = vadd.f32 %v1224, %v1386
        %v1388 = vpop.f32.mrb[0].mxu0
        %1389 = vmatprep.mubr.f32.mxu0 %v364
        %1390 = vmatmul.mubr.f32.gmra.mrb[0].mxu0 %v363
        %v1391 = vpop.f32.mrb[0].mxu0
        %v1392 = vadd.f32 %v1224, %v1391
        %v1393 = vpop.f32.mrb[0].mxu0
        %1394 = vmatprep.mubr.f32.mxu0 %v366
        %1395 = vmatmul.mubr.f32.gmra.mrb[0].mxu0 %v365
        %v1396 = vpop.f32.mrb[0].mxu0
        %v1397 = vadd.f32 %v1224, %v1396
        %v1398 = vpop.f32.mrb[0].mxu0
        %1399 = vmatprep.mubr.f32.mxu0 %v368
        %1400 = vmatmul.mubr.f32.gmra.mrb[0].mxu0 %v367
        %v1401 = vpop.f32.mrb[0].mxu0
        %v1402 = vadd.f32 %v1224, %v1401
        %v1403 = vpop.f32.mrb[0].mxu0
        %1404 = vmatprep.mubr.f32.mxu0 %v370
        %1405 = vmatmul.mubr.f32.gmra.mrb[0].mxu0 %v369
        %v1406 = vpop.f32.mrb[0].mxu0
        %v1407 = vadd.f32 %v1224, %v1406
        %v1408 = vpop.f32.mrb[0].mxu0
        %1409 = vmatprep.mubr.f32.mxu0 %v372
        %1410 = vmatmul.mubr.f32.gmra.mrb[0].mxu0 %v371
        %v1411 = vpop.f32.mrb[0].mxu0
        %v1412 = vadd.f32 %v1224, %v1411
        %v1413 = vpop.f32.mrb[0].mxu0
        %1414 = vmatprep.mubr.f32.mxu0 %v374
        %1415 = vmatmul.mubr.f32.gmra.mrb[0].mxu0 %v373
        %v1416 = vpop.f32.mrb[0].mxu0
        %v1417 = vadd.f32 %v1224, %v1416
        %v1418 = vpop.f32.mrb[0].mxu0
        %1419 = vmatprep.mubr.f32.mxu0 %v376
        %1420 = vmatmul.mubr.f32.gmra.mrb[0].mxu0 %v375
        %v1421 = vpop.f32.mrb[0].mxu0
        %v1422 = vadd.f32 %v1224, %v1421
        %v1423 = vpop.f32.mrb[0].mxu0
        %1424 = vmatprep.mubr.f32.mxu0 %v378
        %1425 = vmatmul.mubr.f32.gmra.mrb[0].mxu0 %v377
        %v1426 = vpop.f32.mrb[0].mxu0
        %v1427 = vadd.f32 %v1224, %v1426
        %v1428 = vpop.f32.mrb[0].mxu0
        %1429 = vmatprep.mubr.f32.mxu0 %v380
        %1430 = vmatmul.mubr.f32.gmra.mrb[0].mxu0 %v379
        %v1431 = vpop.f32.mrb[0].mxu0
        %v1432 = vadd.f32 %v1224, %v1431
        %v1433 = vpop.f32.mrb[0].mxu0
        %1434 = vmatprep.mubr.f32.mxu0 %v382
        %1435 = vmatmul.mubr.f32.gmra.mrb[0].mxu0 %v381
        %v1436 = vpop.f32.mrb[0].mxu0
        %v1437 = vadd.f32 %v1224, %v1436
        %v1438 = vpop.f32.mrb[0].mxu0
        %1439 = vmatprep.mubr.f32.mxu0 %v384
        %1440 = vmatmul.mubr.f32.gmra.mrb[0].mxu0 %v383
        %v1441 = vpop.f32.mrb[0].mxu0
        %v1442 = vadd.f32 %v1224, %v1441
        %v1443 = vpop.f32.mrb[0].mxu0
        %1444 = vmatprep.mubr.f32.mxu0 %v386
        %1445 = vmatmul.mubr.f32.gmra.mrb[0].mxu0 %v385
        %v1446 = vpop.f32.mrb[0].mxu0
        %v1447 = vadd.f32 %v1224, %v1446
        %v1448 = vpop.f32.mrb[0].mxu0
        %1449 = vdwg.mxu0
        %v1450 = vld [vmem:[%s6] sm:$0xff]
        %v1451 = vld [vmem:[%s6 + $0x8] sm:$0xff]
        %v1452 = vld [vmem:[%s6 + $0x10] sm:$0xff]
        %v1453 = vld [vmem:[%s6 + $0x18] sm:$0xff]
        %1454 = vmatprep.subr.mxu0 0.0
        %1455 = vmatpush1.msra.mxu0 %v1292
        %1456 = vmatprep.subr.mxu0 0.0
        %1457 = vmatpush1.msra.mxu0 %v1297
        %1458 = vmatprep.subr.mxu0 0.0
        %1459 = vmatpush1.msra.mxu0 %v1302
        %1460 = vmatprep.subr.mxu0 0.0
        %1461 = vmatpush1.msra.mxu0 %v1307
        %1462 = vmatprep.subr.mxu0 0.0
        %1463 = vmatpush1.msra.mxu0 %v1312
        %1464 = vmatprep.subr.mxu0 0.0
        %1465 = vmatpush1.msra.mxu0 %v1317
        %1466 = vmatprep.subr.mxu0 0.0
        %1467 = vmatpush1.msra.mxu0 %v1322
        %1468 = vmatprep.subr.mxu0 0.0
        %1469 = vmatpush1.msra.mxu0 %v1327
        %1470 = vmatprep.subr.mxu0 0.0
        %1471 = vmatpush1.msra.mxu0 %v1332
        %1472 = vmatprep.subr.mxu0 0.0
        %1473 = vmatpush1.msra.mxu0 %v1337
        %1474 = vmatprep.subr.mxu0 0.0
        %1475 = vmatpush1.msra.mxu0 %v1342
        %1476 = vmatprep.subr.mxu0 0.0
        %1477 = vmatpush1.msra.mxu0 %v1347
        %1478 = vmatprep.subr.mxu0 0.0
        %1479 = vmatpush1.msra.mxu0 %v1352
        %1480 = vmatprep.subr.mxu0 0.0
        %1481 = vmatpush1.msra.mxu0 %v1357
        %1482 = vmatprep.subr.mxu0 0.0
        %1483 = vmatpush1.msra.mxu0 %v1362
        %1484 = vmatprep.subr.mxu0 0.0
        %1485 = vmatpush1.msra.mxu0 %v1367
        %1486 = vmatprep.subr.mxu0 0.0
        %1487 = vmatpush1.msra.mxu0 %v1372
        %1488 = vmatprep.subr.mxu0 0.0
        %1489 = vmatpush1.msra.mxu0 %v1377
        %1490 = vmatprep.subr.mxu0 0.0
        %1491 = vmatpush1.msra.mxu0 %v1382
        %1492 = vmatprep.subr.mxu0 0.0
        %1493 = vmatpush1.msra.mxu0 %v1387
        %1494 = vmatprep.subr.mxu0 0.0
        %1495 = vmatpush1.msra.mxu0 %v1392
        %1496 = vmatprep.subr.mxu0 0.0
        %1497 = vmatpush1.msra.mxu0 %v1397
        %1498 = vmatprep.subr.mxu0 0.0
        %1499 = vmatpush1.msra.mxu0 %v1402
        %1500 = vmatprep.subr.mxu0 0.0
        %1501 = vmatpush1.msra.mxu0 %v1407
        %1502 = vmatprep.subr.mxu0 0.0
        %1503 = vmatpush1.msra.mxu0 %v1412
        %1504 = vmatprep.subr.mxu0 0.0
        %1505 = vmatpush1.msra.mxu0 %v1417
        %1506 = vmatprep.subr.mxu0 0.0
        %1507 = vmatpush1.msra.mxu0 %v1422
        %1508 = vmatprep.subr.mxu0 0.0
        %1509 = vmatpush1.msra.mxu0 %v1427
        %1510 = vmatprep.subr.mxu0 0.0
        %1511 = vmatpush1.msra.mxu0 %v1432
        %1512 = vmatprep.subr.mxu0 0.0
        %1513 = vmatpush1.msra.mxu0 %v1437
        %1514 = vmatprep.subr.mxu0 0.0
        %1515 = vmatpush1.msra.mxu0 %v1442
        %1516 = vmatprep.subr.mxu0 0.0
        %1517 = vmatpush1.msra.mxu0 %v1447
        %1518 = vmatprep.mubr.f32.mxu0 %v1451
        %1519 = vmatmul.mubr.f32.gmra.mrb[0].mxu0 %v1450
        %v1520 = vpop.f32.mrb[0].mxu0
        %v1521 = vadd.f32 0.0, %v1520
        %v1522 = vpop.f32.mrb[0].mxu0
        %1523 = vmatprep.mubr.f32.mxu0 %v1453
        %1524 = vmatmul.mubr.f32.gmra.mrb[0].mxu0 %v1452
        %v1525 = vpop.f32.mrb[0].mxu0
        %v1526 = vadd.f32 0.0, %v1525
        %v1527 = vpop.f32.mrb[0].mxu0
        %1528 = vdwg.mxu0
        %v1529 = vld [vmem:[%s4] sm:$0xff]
        %v1530 = vld [vmem:[%s4 + $0x8] sm:$0xff]
        %v1531 = vld [vmem:[%s4 + $0x10] sm:$0xff]
        %v1532 = vld [vmem:[%s4 + $0x18] sm:$0xff]
        %v1533 = vlaneseq
        %v1534 = vshrl.u32 %v1533, 7
        %v1535 = vsub.s32 0, %v1534
        %v1536 = vrot.slane %v421, %v1535
        %v1538 = vsel %vm1011, %v1521, 0
        %v1541 = vsel %vm1011, %v1526, 0
        %1543 = vmatprep.subr.mxu0 0.0
        %1544 = vmatpush1.msra.mxu0 %v1529
        %1545 = vmatprep.subr.mxu0 0.0
        %1546 = vmatpush1.msra.mxu0 %v1530
        %1547 = vmatprep.subr.mxu0 0.0
        %1548 = vmatpush1.msra.mxu0 %v1531
        %1549 = vmatprep.subr.mxu0 0.0
        %1550 = vmatpush1.msra.mxu0 %v1532
        %1551 = vmatprep.subr.mxu0 0.0
        %1552 = vmatpush1.msra.mxu0 0.0
        %1553 = vmatprep.subr.mxu0 0.0
        %1554 = vmatpush1.msra.mxu0 0.0
        %1555 = vmatprep.subr.mxu0 0.0
        %1556 = vmatpush1.msra.mxu0 0.0
        %1557 = vmatprep.subr.mxu0 0.0
        %1558 = vmatpush1.msra.mxu0 0.0
        %1559 = vmatprep.subr.mxu0 0.0
        %1560 = vmatpush1.msra.mxu0 0.0
        %1561 = vmatprep.subr.mxu0 0.0
        %1562 = vmatpush1.msra.mxu0 0.0
        %1563 = vmatprep.subr.mxu0 0.0
        %1564 = vmatpush1.msra.mxu0 0.0
        %1565 = vmatprep.subr.mxu0 0.0
        %1566 = vmatpush1.msra.mxu0 0.0
        %1567 = vmatprep.subr.mxu0 0.0
        %1568 = vmatpush1.msra.mxu0 0.0
        %1569 = vmatprep.subr.mxu0 0.0
        %1570 = vmatpush1.msra.mxu0 0.0
        %1571 = vmatprep.subr.mxu0 0.0
        %1572 = vmatpush1.msra.mxu0 0.0
        %1573 = vmatprep.subr.mxu0 0.0
        %1574 = vmatpush1.msra.mxu0 0.0
        %1575 = vmatprep.subr.mxu0 0.0
        %1576 = vmatpush1.msra.mxu0 0.0
        %1577 = vmatprep.subr.mxu0 0.0
        %1578 = vmatpush1.msra.mxu0 0.0
        %1579 = vmatprep.subr.mxu0 0.0
        %1580 = vmatpush1.msra.mxu0 0.0
        %1581 = vmatprep.subr.mxu0 0.0
        %1582 = vmatpush1.msra.mxu0 0.0
        %1583 = vmatprep.subr.mxu0 0.0
        %1584 = vmatpush1.msra.mxu0 0.0
        %1585 = vmatprep.subr.mxu0 0.0
        %1586 = vmatpush1.msra.mxu0 0.0
        %1587 = vmatprep.subr.mxu0 0.0
        %1588 = vmatpush1.msra.mxu0 0.0
        %1589 = vmatprep.subr.mxu0 0.0
        %1590 = vmatpush1.msra.mxu0 0.0
        %1591 = vmatprep.subr.mxu0 0.0
        %1592 = vmatpush1.msra.mxu0 0.0
        %1593 = vmatprep.subr.mxu0 0.0
        %1594 = vmatpush1.msra.mxu0 0.0
        %1595 = vmatprep.subr.mxu0 0.0
        %1596 = vmatpush1.msra.mxu0 0.0
        %1597 = vmatprep.subr.mxu0 0.0
        %1598 = vmatpush1.msra.mxu0 0.0
        %1599 = vmatprep.subr.mxu0 0.0
        %1600 = vmatpush1.msra.mxu0 0.0
        %1601 = vmatprep.subr.mxu0 0.0
        %1602 = vmatpush1.msra.mxu0 0.0
        %1603 = vmatprep.subr.mxu0 0.0
        %1604 = vmatpush1.msra.mxu0 0.0
        %1605 = vmatprep.subr.mxu0 0.0
        %1606 = vmatpush1.msra.mxu0 0.0
        %1607 = vmatprep.mubr.f32.mxu0 0.0
        %1608 = vmatmul.mubr.f32.gmra.mrb[0].mxu0 %v1538
        %v1609 = vpop.f32.mrb[0].mxu0
        %v1610 = vadd.f32 %v1536, %v1609
        %v1611 = vpop.f32.mrb[0].mxu0
        %1612 = vmatprep.mubr.f32.mxu0 0.0
        %1613 = vmatmul.mubr.f32.gmra.mrb[0].mxu0 %v1541
        %v1614 = vpop.f32.mrb[0].mxu0
        %v1615 = vadd.f32 %v1536, %v1614
        %v1616 = vpop.f32.mrb[0].mxu0
        %1617 = vdwg.mxu0
        %v1618 = vmax.f32 %v1610, 0.0
        %v1619 = vmax.f32 %v1615, 0.0
        %v1620 = vld [vmem:[%s5] sm:$0xff]
        %v1621 = vld [vmem:[%s5 + $0x8] sm:$0xff]
        %v1622 = vlaneseq
        %v1623 = vshrl.u32 %v1622, 7
        %v1624 = vsub.s32 0, %v1623
        %v1625 = vrot.slane %v422, %v1624
        %vm1626 = vcmask 130048
        %v1628 = vsel %vm1626, %v1618, 0
        %v1631 = vsel %vm1626, %v1619, 0
        %1633 = vmatprep.subr.mxu0 0.0
        %1634 = vmatpush1.msra.mxu0 %v1620
        %1635 = vmatprep.subr.mxu0 0.0
        %1636 = vmatpush1.msra.mxu0 %v1621
        %1637 = vmatprep.subr.mxu0 0.0
        %1638 = vmatpush1.msra.mxu0 0.0
        %1639 = vmatprep.subr.mxu0 0.0
        %1640 = vmatpush1.msra.mxu0 0.0
        %1641 = vmatprep.subr.mxu0 0.0
        %1642 = vmatpush1.msra.mxu0 0.0
        %1643 = vmatprep.subr.mxu0 0.0
        %1644 = vmatpush1.msra.mxu0 0.0
        %1645 = vmatprep.subr.mxu0 0.0
        %1646 = vmatpush1.msra.mxu0 0.0
        %1647 = vmatprep.subr.mxu0 0.0
        %1648 = vmatpush1.msra.mxu0 0.0
        %1649 = vmatprep.subr.mxu0 0.0
        %1650 = vmatpush1.msra.mxu0 0.0
        %1651 = vmatprep.subr.mxu0 0.0
        %1652 = vmatpush1.msra.mxu0 0.0
        %1653 = vmatprep.subr.mxu0 0.0
        %1654 = vmatpush1.msra.mxu0 0.0
        %1655 = vmatprep.subr.mxu0 0.0
        %1656 = vmatpush1.msra.mxu0 0.0
        %1657 = vmatprep.subr.mxu0 0.0
        %1658 = vmatpush1.msra.mxu0 0.0
        %1659 = vmatprep.subr.mxu0 0.0
        %1660 = vmatpush1.msra.mxu0 0.0
        %1661 = vmatprep.subr.mxu0 0.0
        %1662 = vmatpush1.msra.mxu0 0.0
        %1663 = vmatprep.subr.mxu0 0.0
        %1664 = vmatpush1.msra.mxu0 0.0
        %1665 = vmatprep.subr.mxu0 0.0
        %1666 = vmatpush1.msra.mxu0 0.0
        %1667 = vmatprep.subr.mxu0 0.0
        %1668 = vmatpush1.msra.mxu0 0.0
        %1669 = vmatprep.subr.mxu0 0.0
        %1670 = vmatpush1.msra.mxu0 0.0
        %1671 = vmatprep.subr.mxu0 0.0
        %1672 = vmatpush1.msra.mxu0 0.0
        %1673 = vmatprep.subr.mxu0 0.0
        %1674 = vmatpush1.msra.mxu0 0.0
        %1675 = vmatprep.subr.mxu0 0.0
        %1676 = vmatpush1.msra.mxu0 0.0
        %1677 = vmatprep.subr.mxu0 0.0
        %1678 = vmatpush1.msra.mxu0 0.0
        %1679 = vmatprep.subr.mxu0 0.0
        %1680 = vmatpush1.msra.mxu0 0.0
        %1681 = vmatprep.subr.mxu0 0.0
        %1682 = vmatpush1.msra.mxu0 0.0
        %1683 = vmatprep.subr.mxu0 0.0
        %1684 = vmatpush1.msra.mxu0 0.0
        %1685 = vmatprep.subr.mxu0 0.0
        %1686 = vmatpush1.msra.mxu0 0.0
        %1687 = vmatprep.subr.mxu0 0.0
        %1688 = vmatpush1.msra.mxu0 0.0
        %1689 = vmatprep.subr.mxu0 0.0
        %1690 = vmatpush1.msra.mxu0 0.0
        %1691 = vmatprep.subr.mxu0 0.0
        %1692 = vmatpush1.msra.mxu0 0.0
        %1693 = vmatprep.subr.mxu0 0.0
        %1694 = vmatpush1.msra.mxu0 0.0
        %1695 = vmatprep.subr.mxu0 0.0
        %1696 = vmatpush1.msra.mxu0 0.0
        %1697 = vmatprep.mubr.f32.mxu0 0.0
        %1698 = vmatmul.mubr.f32.gmra.mrb[0].mxu0 %v1628
        %v1699 = vpop.f32.mrb[0].mxu0
        %v1700 = vadd.f32 %v1625, %v1699
        %v1701 = vpop.f32.mrb[0].mxu0
        %1702 = vmatprep.mubr.f32.mxu0 0.0
        %1703 = vmatmul.mubr.f32.gmra.mrb[0].mxu0 %v1631
        %v1704 = vpop.f32.mrb[0].mxu0
        %v1705 = vadd.f32 %v1625, %v1704
        %v1706 = vpop.f32.mrb[0].mxu0
        %1707 = vdwg.mxu0
        %1708 = vst [vmem:[%s314] sm:$0xff] %v1700
        %1709 = vst [vmem:[%s314 + $0x8] sm:$0xff] %v1705
        %s1710 = sand.u32 %s204, 1
        %s1711 = scalar_lea.sflag [#allocation4], %s1710
        %s1712 = sand.u32 %s204, 1
        %s1713 = smul.addr %s1712, 16
        %s1714 = scalar_lea.vmem [#allocation5], %s1713
        // Predicated region
        $region57: #{tpu_custom_call.1} parent=51 // pred_check
          %p1715 = pneg %p214
        $region58: #{tpu_custom_call.1} parent=51 // pred_check_branch
          %1717 = sbr.rel (%p1715) target = $region60
        $region59: #{tpu_custom_call.1} parent=51 // pred_region
          %s1718 = smul.u32 2, %s23
          %s1720 = ssub.s32 256, 256
          %1721 = vsyncadd %s1711, %s1720
          %s1722 = smul.addr %s1718, 128
          %s1723 = scalar_lea.hbm %s8, %s1722
          %s1724 = sshll.u32 %s1714, 4
          %s1725 = int_to_ptr.vmem [resolvable:$true] %s1724
          %1730 = dma.vmem_to_hbm [thread:$0]  %s1725, 256, %s1723, %s1711, 128, 128, 8
        $region60: #{tpu_custom_call.1} parent=51 // pred_fallthru
          _
      $region52: #{tpu_custom_call.1} parent=5 // pred_fallthru
        _
      %p1731 = scmp.le.s32.totalorder 2, %s18
      // Predicated region
      $region61: #{tpu_custom_call.1} parent=5 // pred_check
        %p1732 = pneg %p1731
      $region62: #{tpu_custom_call.1} parent=5 // pred_check_branch
        %1734 = sbr.rel (%p1732) target = $region64
      $region63: #{tpu_custom_call.1} parent=5 // pred_region
        %s1735 = ssub.s32 %s18, 2
        // Predicated region
        $region65: #{tpu_custom_call.1} parent=63 // pred_check
          %p1736 = pneg %p220
        $region66: #{tpu_custom_call.1} parent=63 // pred_check_branch
          %1738 = sbr.rel (%p1736) target = $region68
        $region67: #{tpu_custom_call.1} parent=63 // pred_region
          %s1739 = sand.u32 %s205, 1
          %s1740 = scalar_lea.sflag [#allocation4], %s1739
          %s1741 = sand.u32 %s205, 1
          %s1742 = smul.addr %s1741, 16
          %s1743 = scalar_lea.vmem [#allocation5], %s1742
          %1744 = dma.done %s1740, 256
        $region68: #{tpu_custom_call.1} parent=63 // pred_fallthru
          _
      $region64: #{tpu_custom_call.1} parent=5 // pred_fallthru
        _
    $region6: #{tpu_custom_call.1} parent=1 // loop_footer
      %s22 = sadd.s32 1, %s18
    $region7: #{tpu_custom_call.1} parent=1 // loop_footer_branch
      %17 = sbr.rel target = $region3
    $region8: #{tpu_custom_call.1} parent=1 // loop_exit
      _
    %1745 = vsyncpa [#allocation3], 1
    %s1746 = scalar_lea.sflag [#allocation3], 1
    %1747 = vsyncpa %s1746, 1
    %1748 = vsyncpa [#allocation4], 1
    %s1749 = scalar_lea.sflag [#allocation4], 1
    %1750 = vsyncpa %s1749, 1

</llo_original>
